<compile_context>
chip_gen: v5e
topology: v5e:2x2
jax: 0.10.0
libtpu: 0.0.40
codegen_flags: <defaults>
</compile_context>

<pallas_src>
import functools

import jax
import jax.numpy as jnp
from jax.experimental import pallas as pl
from jax.experimental.pallas import tpu as pltpu

_LANE = 128


def _round_up(x, m):
    return ((x + m - 1) // m) * m


def _pad2d(a, rows, cols):
    r, c = a.shape
    return jnp.pad(a, ((0, rows - r), (0, cols - c)))


def _choose_tiles(n):
    """Pick (n_pad, tm, tk) with tm | n_pad and tk | n_pad, (8,128)-aligned.

    Small graphs: one k-band (tk = n_pad) and >=2 row tiles so the 'parallel'
    row axis can be sharded across both v7x TensorCores.
    Large graphs: (512, 2048) bf16 A tiles (2 MiB) streamed over a k grid axis.
    """
    n_pad = _round_up(n, _LANE)
    if n_pad <= 1024:
        tm = n_pad // 2 if n_pad >= 256 else max(n_pad // 2, 8)
        return n_pad, tm, n_pad
    tk = 2048
    n_pad = _round_up(n, tk)
    tm = 512
    return n_pad, tm, tk


def _vmem_limit(*byte_counts):
    """Tile-footprint-derived scoped-VMEM limit with headroom, clamped."""
    total = int(sum(byte_counts) * 1.5) + (4 << 20)
    return max(16 << 20, min(total, 100 << 20))


# ----------------------------------------------------------------------------
# Kernel 1: feature transform  XW = X @ W   (row-tiled, W resident)
# ----------------------------------------------------------------------------
def _xw_kernel(x_ref, w_ref, out_ref):
    out_ref[...] = jnp.dot(
        x_ref[...], w_ref[...], preferred_element_type=jnp.float32
    ).astype(out_ref.dtype)


def _feature_transform(x_pad, w_pad, *, tm):
    n_pad, c_in = x_pad.shape
    c_out = w_pad.shape[1]
    vmem = _vmem_limit(
        2 * tm * c_in * 2,        # X tiles (double buffered, bf16)
        2 * c_in * c_out * 2,     # W (resident, conservatively x2)
        2 * tm * c_out * 2,       # out tiles
    )
    return pl.pallas_call(
        _xw_kernel,
        out_shape=jax.ShapeDtypeStruct((n_pad, c_out), jnp.bfloat16),
        grid=(n_pad // tm,),
        in_specs=[
            pl.BlockSpec((tm, c_in), lambda i: (i, 0)),       # X row tile
            pl.BlockSpec((c_in, c_out), lambda i: (0, 0)),    # W (resident)
        ],
        out_specs=pl.BlockSpec((tm, c_out), lambda i: (i, 0)),
        compiler_params=pltpu.CompilerParams(
            dimension_semantics=("parallel",),
            vmem_limit_bytes=vmem,
        ),
    )(x_pad, w_pad)


# ----------------------------------------------------------------------------
# Kernel 2/3: aggregation  out = A_hat @ XW + b  (+ optional ReLU, optional
#             fused @W2 in the epilogue).  Grid: (row tiles "parallel",
#             k tiles "arbitrary").  XW is fully VMEM-resident and sliced
#             in-kernel; only A_hat tiles stream from HBM.
# ----------------------------------------------------------------------------
def _agg_kernel(*refs, apply_relu, fuse_w2, tk):
    if fuse_w2:
        a_ref, xw_ref, b_ref, w2_ref, out_ref, acc_ref = refs
    else:
        a_ref, xw_ref, b_ref, out_ref, acc_ref = refs
        w2_ref = None

    k = pl.program_id(1)

    @pl.when(k == 0)
    def _():
        acc_ref[...] = jnp.zeros_like(acc_ref)

    k0 = pl.multiple_of(k * tk, tk)
    xw_tile = xw_ref[pl.ds(k0, tk), :]                      # slice resident XW
    acc_ref[...] += jnp.dot(
        a_ref[...], xw_tile, preferred_element_type=jnp.float32
    )

    @pl.when(k == pl.num_programs(1) - 1)
    def _():
        y = acc_ref[...] + b_ref[...]
        if apply_relu:
            y = jnp.maximum(y, 0.0)
        if fuse_w2:
            # Fused second feature transform.  NOTE: padded rows carry
            # relu(b1) @ W2 here; this is neutralized downstream because
            # A_hat's padded columns are zero and final rows are sliced off.
            y = jnp.dot(
                y.astype(w2_ref.dtype), w2_ref[...],
                preferred_element_type=jnp.float32,
            )
        out_ref[...] = y.astype(out_ref.dtype)


def _aggregate(a_hat, xw, bias, *, tm, tk, apply_relu, w2=None, out_dtype):
    n_pad = a_hat.shape[0]
    c_mid = xw.shape[1]
    fuse_w2 = w2 is not None
    c_out = w2.shape[1] if fuse_w2 else c_mid

    kernel = functools.partial(
        _agg_kernel, apply_relu=apply_relu, fuse_w2=fuse_w2, tk=tk
    )

    in_specs = [
        pl.BlockSpec((tm, tk), lambda i, k: (i, k)),          # A_hat tile (streamed)
        pl.BlockSpec((n_pad, c_mid), lambda i, k: (0, 0)),    # XW (VMEM-resident)
        pl.BlockSpec((1, c_mid), lambda i, k: (0, 0)),        # bias (resident)
    ]
    args = [a_hat, xw, bias]
    if fuse_w2:
        in_specs.append(pl.BlockSpec((c_mid, c_out), lambda i, k: (0, 0)))
        args.append(w2)

    out_bytes = jnp.dtype(out_dtype).itemsize
    vmem = _vmem_limit(
        2 * tm * tk * 2,            # A tiles (double buffered, bf16)
        2 * n_pad * c_mid * 2,      # resident XW (conservatively x2)
        c_mid * 4,                  # bias
        (c_mid * c_out * 2) if fuse_w2 else 0,
        tm * c_mid * 4,             # f32 accumulator
        2 * tm * c_out * out_bytes, # out tiles
    )

    return pl.pallas_call(
        kernel,
        out_shape=jax.ShapeDtypeStruct((n_pad, c_out), out_dtype),
        grid=(n_pad // tm, n_pad // tk),
        in_specs=in_specs,
        out_specs=pl.BlockSpec((tm, c_out), lambda i, k: (i, 0)),
        scratch_shapes=[pltpu.VMEM((tm, c_mid), jnp.float32)],
        compiler_params=pltpu.CompilerParams(
            dimension_semantics=("parallel", "arbitrary"),
            vmem_limit_bytes=vmem,
        ),
    )(*args)


# ----------------------------------------------------------------------------
# Glue: dense symmetrically-normalized adjacency (PyG gcn_norm semantics).
# Built ONCE per graph (hoisted out of the forward).
# ----------------------------------------------------------------------------
def build_normalized_adj(edge_index, edge_weight, num_nodes, n_pad):
    """A_hat = D^-1/2 (A + I_remaining) D^-1/2, padded to n_pad, cast to bf16.

    A_hat[target, source] so that out = A_hat @ X matches PyG message passing
    (flow source->target).  Self loops are only added where missing, matching
    torch_geometric add_remaining_self_loops.
    """
    src, tgt = edge_index[0], edge_index[1]
    if edge_weight is None:
        edge_weight = jnp.ones(src.shape[0], dtype=jnp.float32)

    adj = jnp.zeros((num_nodes, num_nodes), jnp.float32).at[tgt, src].add(edge_weight)

    is_loop = (src == tgt).astype(jnp.float32)
    has_loop = jnp.zeros((num_nodes,), jnp.float32).at[src].max(is_loop) > 0
    adj = adj + jnp.diag(jnp.where(has_loop, 0.0, 1.0))

    deg = adj.sum(axis=1)                                  # weighted in-degree
    dinv = jnp.where(deg > 0, jax.lax.rsqrt(deg), 0.0)
    a_hat = dinv[:, None] * adj * dinv[None, :]

    a_hat = jnp.pad(a_hat, ((0, n_pad - num_nodes), (0, n_pad - num_nodes)))
    return a_hat.astype(jnp.bfloat16)


# ----------------------------------------------------------------------------
# Full GCN forward (inference): dropout -> conv1 -> relu -> dropout -> conv2.
# A_hat is precomputed (build_normalized_adj) and passed in.
# ----------------------------------------------------------------------------
def gcn_forward(params, x, a_hat):
    n, c_in = x.shape
    hidden = params["w1"].shape[1]
    c_out = params["w2"].shape[1]

    n_pad, tm, tk = _choose_tiles(n)
    assert a_hat.shape == (n_pad, n_pad), "a_hat padding must match _choose_tiles"

    c_in_p = _round_up(c_in, _LANE)
    hid_p = _round_up(hidden, _LANE)
    out_p = _round_up(c_out, _LANE)

    x_pad = _pad2d(x, n_pad, c_in_p).astype(jnp.bfloat16)
    w1 = _pad2d(params["w1"], c_in_p, hid_p).astype(jnp.bfloat16)
    b1 = _pad2d(params["b1"].reshape(1, -1), 1, hid_p).astype(jnp.float32)
    w2 = _pad2d(params["w2"], hid_p, out_p).astype(jnp.bfloat16)
    b2 = _pad2d(params["b2"].reshape(1, -1), 1, out_p).astype(jnp.float32)

    # F.dropout(p=0.2, training=False) is identity.
    xw1 = _feature_transform(x_pad, w1, tm=tm)

    # conv1 aggregation + bias + relu, fused with the conv2 feature transform:
    # xw2 = relu(A_hat @ xw1 + b1) @ W2
    xw2 = _aggregate(a_hat, xw1, b1, tm=tm, tk=tk,
                     apply_relu=True, w2=w2, out_dtype=jnp.bfloat16)

    # conv2 aggregation + bias.
    out = _aggregate(a_hat, xw2, b2, tm=tm, tk=tk,
                     apply_relu=False, out_dtype=jnp.float32)

    return out[:n, :c_out]


# ----------------------------------------------------------------------------
# Pure-JAX f32 reference (same gcn_norm semantics) for a sanity check.
# ----------------------------------------------------------------------------
def gcn_reference(params, x, edge_index, edge_weight=None):
    n = x.shape[0]
    src, tgt = edge_index[0], edge_index[1]
    ew = (jnp.ones(src.shape[0], jnp.float32) if edge_weight is None
          else edge_weight)
    adj = jnp.zeros((n, n), jnp.float32).at[tgt, src].add(ew)
    is_loop = (src == tgt).astype(jnp.float32)
    has_loop = jnp.zeros((n,), jnp.float32).at[src].max(is_loop) > 0
    adj = adj + jnp.diag(jnp.where(has_loop, 0.0, 1.0))
    deg = adj.sum(axis=1)
    dinv = jnp.where(deg > 0, jax.lax.rsqrt(deg), 0.0)
    a_hat = dinv[:, None] * adj * dinv[None, :]
    h = jnp.maximum(a_hat @ (x @ params["w1"]) + params["b1"], 0.0)
    return a_hat @ (h @ params["w2"]) + params["b2"]


def init_params(key, in_channels, hidden_channels, out_channels):
    k1, k2 = jax.random.split(key)

    def glorot(k, fan_in, fan_out):
        lim = jnp.sqrt(6.0 / (fan_in + fan_out))
        return jax.random.uniform(k, (fan_in, fan_out), jnp.float32, -lim, lim)

    return {
        "w1": glorot(k1, in_channels, hidden_channels),
        "b1": jnp.zeros((hidden_channels,), jnp.float32),
        "w2": glorot(k2, hidden_channels, out_channels),
        "b2": jnp.zeros((out_channels,), jnp.float32),
    }


if __name__ == "__main__":
    key = jax.random.PRNGKey(0)
    k_x, k_e, k_p = jax.random.split(key, 3)

    num_nodes = 16
    in_channels, hidden_channels, out_channels = 8, 32, 4
    num_edges = 40

    x = jax.random.normal(k_x, (num_nodes, in_channels), jnp.float32)
    edge_index = jax.random.randint(k_e, (2, num_edges), 0, num_nodes, jnp.int32)
    params = init_params(k_p, in_channels, hidden_channels, out_channels)

    # A_hat built once per graph (hoisted out of the forward, per perf review).
    n_pad, _, _ = _choose_tiles(num_nodes)
    a_hat = build_normalized_adj(edge_index, None, num_nodes, n_pad)
    a_hat = jax.block_until_ready(a_hat)

    out = jax.jit(gcn_forward)(params, x, a_hat)
    out = jax.block_until_ready(out)

    ref = gcn_reference(params, x, edge_index)

    assert out.shape == (num_nodes, out_channels)
    assert bool(jnp.all(jnp.isfinite(out)))
    # bf16 A_hat / X / W with f32 accumulation -> loose tolerance vs f32 reference.
    assert bool(jnp.allclose(out, ref, atol=5e-2, rtol=5e-2))

    print("KERNEL_OK")
</pallas_src>

<mosaic_0001>
module attributes {stable_mosaic.version = 11 : i64} {
  func.func @_xw_kernel(%arg0: i32, %arg1: memref<64x128xbf16, #tpu.memory_space<vmem>>, %arg2: memref<128x128xbf16, #tpu.memory_space<vmem>>, %arg3: memref<64x128xbf16, #tpu.memory_space<vmem>>) attributes {dimension_semantics = [#tpu.dimension_semantics<parallel>], iteration_bounds = array<i64: 2>, scalar_prefetch = 0 : i64, scratch_operands = 0 : i64, tpu.core_type = #tpu.core_type<tc>, window_params = [{transform_indices = @transform_0, window_bounds = array<i64: 64, 128>}, {pipeline_mode = #tpu.pipeline_mode<synchronous>, transform_indices = @transform_1, window_bounds = array<i64: 128, 128>}, {transform_indices = @transform_2, window_bounds = array<i64: 64, 128>}]} {
    %c0 = arith.constant 0 : index
    %c0_0 = arith.constant 0 : index
    %0 = vector.load %arg1[%c0, %c0_0] : memref<64x128xbf16, #tpu.memory_space<vmem>>, vector<64x128xbf16>
    %c0_1 = arith.constant 0 : index
    %c0_2 = arith.constant 0 : index
    %1 = vector.load %arg2[%c0_1, %c0_2] : memref<128x128xbf16, #tpu.memory_space<vmem>>, vector<128x128xbf16>
    %cst = arith.constant dense<0.000000e+00> : vector<64x128xf32>
    %2 = tpu.matmul %0, %1, %cst {dimension_numbers = #tpu.dot_dimension_numbers<[1], [0], [0], [1], [0, 0, 1, 1], [], []>} : vector<64x128xbf16>, vector<128x128xbf16>, vector<64x128xf32> -> vector<64x128xf32>
    %3 = arith.truncf %2 : vector<64x128xf32> to vector<64x128xbf16>
    %c0_3 = arith.constant 0 : index
    %c0_4 = arith.constant 0 : index
    %4 = vector.load %arg3[%c0_3, %c0_4] : memref<64x128xbf16, #tpu.memory_space<vmem>>, vector<64x128xbf16>
    tpu.vector_store %arg3[%c0_3, %c0_4], %3 {strides = array<i32>} : memref<64x128xbf16, #tpu.memory_space<vmem>>, vector<64x128xbf16>,
    return
  }
  func.func @transform_0(%arg0: i32) -> (i32, i32) {
    %c0_i32 = arith.constant 0 : i32
    %c0_i32_0 = arith.constant 0 : i32
    return %arg0, %c0_i32 : i32, i32
  }
  func.func @transform_1(%arg0: i32) -> (i32, i32) {
    %c0_i32 = arith.constant 0 : i32
    %c0_i32_0 = arith.constant 0 : i32
    %c0_i32_1 = arith.constant 0 : i32
    return %c0_i32, %c0_i32_0 : i32, i32
  }
  func.func @transform_2(%arg0: i32) -> (i32, i32) {
    %c0_i32 = arith.constant 0 : i32
    %c0_i32_0 = arith.constant 0 : i32
    return %arg0, %c0_i32 : i32, i32
  }
}

module attributes {stable_mosaic.version = 11 : i64} {
  func.func @_agg_kernel(%arg0: i32, %arg1: i32, %arg2: memref<64x128xbf16, #tpu.memory_space<vmem>>, %arg3: memref<128x128xbf16, #tpu.memory_space<vmem>>, %arg4: memref<1x128xf32, #tpu.memory_space<vmem>>, %arg5: memref<128x128xbf16, #tpu.memory_space<vmem>>, %arg6: memref<64x128xbf16, #tpu.memory_space<vmem>>, %arg7: memref<64x128xf32, #tpu.memory_space<vmem>>) attributes {dimension_semantics = [#tpu.dimension_semantics<parallel>, #tpu.dimension_semantics<arbitrary>], iteration_bounds = array<i64: 2, 1>, scalar_prefetch = 0 : i64, scratch_operands = 1 : i64, tpu.core_type = #tpu.core_type<tc>, window_params = [{transform_indices = @transform_0, window_bounds = array<i64: 64, 128>}, {pipeline_mode = #tpu.pipeline_mode<synchronous>, transform_indices = @transform_1, window_bounds = array<i64: 128, 128>}, {pipeline_mode = #tpu.pipeline_mode<synchronous>, transform_indices = @transform_2, window_bounds = array<i64: 1, 128>}, {pipeline_mode = #tpu.pipeline_mode<synchronous>, transform_indices = @transform_3, window_bounds = array<i64: 128, 128>}, {transform_indices = @transform_4, window_bounds = array<i64: 64, 128>}]} {
    %c0_i32 = arith.constant 0 : i32
    %0 = arith.cmpi eq, %arg1, %c0_i32 : i32
    %1 = arith.extui %0 : i1 to i32
    %c0_i32_0 = arith.constant 0 : i32
    %2 = arith.cmpi ne, %1, %c0_i32_0 : i32
    scf.if %2 {
      %cst_9 = arith.constant 0.000000e+00 : f32
      %15 = vector.broadcast %cst_9 : f32 to vector<64x128xf32>
      %c0_10 = arith.constant 0 : index
      %c0_11 = arith.constant 0 : index
      %16 = vector.load %arg7[%c0_10, %c0_11] : memref<64x128xf32, #tpu.memory_space<vmem>>, vector<64x128xf32>
      tpu.vector_store %arg7[%c0_10, %c0_11], %15 {strides = array<i32>} : memref<64x128xf32, #tpu.memory_space<vmem>>, vector<64x128xf32>,
    } else {
    }
    %c128_i32 = arith.constant 128 : i32
    %3 = arith.muli %arg1, %c128_i32 : i32
    %4 = tpu.assume_multiple %3, 128 : i32
    %5 = arith.index_cast %4 : i32 to index
    %c0 = arith.constant 0 : index
    %6 = vector.load %arg3[%5, %c0] : memref<128x128xbf16, #tpu.memory_space<vmem>>, vector<128x128xbf16>
    %c0_1 = arith.constant 0 : index
    %c0_2 = arith.constant 0 : index
    %7 = vector.load %arg7[%c0_1, %c0_2] : memref<64x128xf32, #tpu.memory_space<vmem>>, vector<64x128xf32>
    %c0_3 = arith.constant 0 : index
    %c0_4 = arith.constant 0 : index
    %8 = vector.load %arg2[%c0_3, %c0_4] : memref<64x128xbf16, #tpu.memory_space<vmem>>, vector<64x128xbf16>
    %cst = arith.constant dense<0.000000e+00> : vector<64x128xf32>
    %9 = tpu.matmul %8, %6, %cst {dimension_numbers = #tpu.dot_dimension_numbers<[1], [0], [0], [1], [0, 0, 1, 1], [], []>} : vector<64x128xbf16>, vector<128x128xbf16>, vector<64x128xf32> -> vector<64x128xf32>
    %10 = arith.addf %7, %9 : vector<64x128xf32>
    %c0_5 = arith.constant 0 : index
    %c0_6 = arith.constant 0 : index
    %11 = vector.load %arg7[%c0_5, %c0_6] : memref<64x128xf32, #tpu.memory_space<vmem>>, vector<64x128xf32>
    tpu.vector_store %arg7[%c0_5, %c0_6], %10 {strides = array<i32>} : memref<64x128xf32, #tpu.memory_space<vmem>>, vector<64x128xf32>,
    %c0_i32_7 = arith.constant 0 : i32
    %12 = arith.cmpi eq, %arg1, %c0_i32_7 : i32
    %13 = arith.extui %12 : i1 to i32
    %c0_i32_8 = arith.constant 0 : i32
    %14 = arith.cmpi ne, %13, %c0_i32_8 : i32
    scf.if %14 {
      %c0_9 = arith.constant 0 : index
      %c0_10 = arith.constant 0 : index
      %15 = vector.load %arg7[%c0_9, %c0_10] : memref<64x128xf32, #tpu.memory_space<vmem>>, vector<64x128xf32>
      %c0_11 = arith.constant 0 : index
      %c0_12 = arith.constant 0 : index
      %16 = vector.load %arg4[%c0_11, %c0_12] : memref<1x128xf32, #tpu.memory_space<vmem>>, vector<1x128xf32>
      %17 = vector.broadcast %16 : vector<1x128xf32> to vector<64x128xf32>
      %18 = arith.addf %15, %17 : vector<64x128xf32>
      %cst_13 = arith.constant 0.000000e+00 : f32
      %19 = vector.broadcast %cst_13 : f32 to vector<64x128xf32>
      %20 = arith.maximumf %18, %19 : vector<64x128xf32>
      %21 = arith.truncf %20 : vector<64x128xf32> to vector<64x128xbf16>
      %c0_14 = arith.constant 0 : index
      %c0_15 = arith.constant 0 : index
      %22 = vector.load %arg5[%c0_14, %c0_15] : memref<128x128xbf16, #tpu.memory_space<vmem>>, vector<128x128xbf16>
      %cst_16 = arith.constant dense<0.000000e+00> : vector<64x128xf32>
      %23 = tpu.matmul %21, %22, %cst_16 {dimension_numbers = #tpu.dot_dimension_numbers<[1], [0], [0], [1], [0, 0, 1, 1], [], []>} : vector<64x128xbf16>, vector<128x128xbf16>, vector<64x128xf32> -> vector<64x128xf32>
      %24 = arith.truncf %23 : vector<64x128xf32> to vector<64x128xbf16>
      %c0_17 = arith.constant 0 : index
      %c0_18 = arith.constant 0 : index
      %25 = vector.load %arg6[%c0_17, %c0_18] : memref<64x128xbf16, #tpu.memory_space<vmem>>, vector<64x128xbf16>
      tpu.vector_store %arg6[%c0_17, %c0_18], %24 {strides = array<i32>} : memref<64x128xbf16, #tpu.memory_space<vmem>>, vector<64x128xbf16>,
    } else {
    }
    return
  }
  func.func @transform_0(%arg0: i32, %arg1: i32) -> (i32, i32) {
    %c0_i32 = arith.constant 0 : i32
    return %arg0, %arg1 : i32, i32
  }
  func.func @transform_1(%arg0: i32, %arg1: i32) -> (i32, i32) {
    %c0_i32 = arith.constant 0 : i32
    %c0_i32_0 = arith.constant 0 : i32
    %c0_i32_1 = arith.constant 0 : i32
    return %c0_i32, %c0_i32_0 : i32, i32
  }
  func.func @transform_2(%arg0: i32, %arg1: i32) -> (i32, i32) {
    %c0_i32 = arith.constant 0 : i32
    %c0_i32_0 = arith.constant 0 : i32
    %c0_i32_1 = arith.constant 0 : i32
    return %c0_i32, %c0_i32_0 : i32, i32
  }
  func.func @transform_3(%arg0: i32, %arg1: i32) -> (i32, i32) {
    %c0_i32 = arith.constant 0 : i32
    %c0_i32_0 = arith.constant 0 : i32
    %c0_i32_1 = arith.constant 0 : i32
    return %c0_i32, %c0_i32_0 : i32, i32
  }
  func.func @transform_4(%arg0: i32, %arg1: i32) -> (i32, i32) {
    %c0_i32 = arith.constant 0 : i32
    %c0_i32_0 = arith.constant 0 : i32
    return %arg0, %c0_i32 : i32, i32
  }
}

module attributes {stable_mosaic.version = 11 : i64} {
  func.func @_agg_kernel(%arg0: i32, %arg1: i32, %arg2: memref<64x128xbf16, #tpu.memory_space<vmem>>, %arg3: memref<128x128xbf16, #tpu.memory_space<vmem>>, %arg4: memref<1x128xf32, #tpu.memory_space<vmem>>, %arg5: memref<64x128xf32, #tpu.memory_space<vmem>>, %arg6: memref<64x128xf32, #tpu.memory_space<vmem>>) attributes {dimension_semantics = [#tpu.dimension_semantics<parallel>, #tpu.dimension_semantics<arbitrary>], iteration_bounds = array<i64: 2, 1>, scalar_prefetch = 0 : i64, scratch_operands = 1 : i64, tpu.core_type = #tpu.core_type<tc>, window_params = [{transform_indices = @transform_0, window_bounds = array<i64: 64, 128>}, {pipeline_mode = #tpu.pipeline_mode<synchronous>, transform_indices = @transform_1, window_bounds = array<i64: 128, 128>}, {pipeline_mode = #tpu.pipeline_mode<synchronous>, transform_indices = @transform_2, window_bounds = array<i64: 1, 128>}, {transform_indices = @transform_3, window_bounds = array<i64: 64, 128>}]} {
    %c0_i32 = arith.constant 0 : i32
    %0 = arith.cmpi eq, %arg1, %c0_i32 : i32
    %1 = arith.extui %0 : i1 to i32
    %c0_i32_0 = arith.constant 0 : i32
    %2 = arith.cmpi ne, %1, %c0_i32_0 : i32
    scf.if %2 {
      %cst_9 = arith.constant 0.000000e+00 : f32
      %15 = vector.broadcast %cst_9 : f32 to vector<64x128xf32>
      %c0_10 = arith.constant 0 : index
      %c0_11 = arith.constant 0 : index
      %16 = vector.load %arg6[%c0_10, %c0_11] : memref<64x128xf32, #tpu.memory_space<vmem>>, vector<64x128xf32>
      tpu.vector_store %arg6[%c0_10, %c0_11], %15 {strides = array<i32>} : memref<64x128xf32, #tpu.memory_space<vmem>>, vector<64x128xf32>,
    } else {
    }
    %c128_i32 = arith.constant 128 : i32
    %3 = arith.muli %arg1, %c128_i32 : i32
    %4 = tpu.assume_multiple %3, 128 : i32
    %5 = arith.index_cast %4 : i32 to index
    %c0 = arith.constant 0 : index
    %6 = vector.load %arg3[%5, %c0] : memref<128x128xbf16, #tpu.memory_space<vmem>>, vector<128x128xbf16>
    %c0_1 = arith.constant 0 : index
    %c0_2 = arith.constant 0 : index
    %7 = vector.load %arg6[%c0_1, %c0_2] : memref<64x128xf32, #tpu.memory_space<vmem>>, vector<64x128xf32>
    %c0_3 = arith.constant 0 : index
    %c0_4 = arith.constant 0 : index
    %8 = vector.load %arg2[%c0_3, %c0_4] : memref<64x128xbf16, #tpu.memory_space<vmem>>, vector<64x128xbf16>
    %cst = arith.constant dense<0.000000e+00> : vector<64x128xf32>
    %9 = tpu.matmul %8, %6, %cst {dimension_numbers = #tpu.dot_dimension_numbers<[1], [0], [0], [1], [0, 0, 1, 1], [], []>} : vector<64x128xbf16>, vector<128x128xbf16>, vector<64x128xf32> -> vector<64x128xf32>
    %10 = arith.addf %7, %9 : vector<64x128xf32>
    %c0_5 = arith.constant 0 : index
    %c0_6 = arith.constant 0 : index
    %11 = vector.load %arg6[%c0_5, %c0_6] : memref<64x128xf32, #tpu.memory_space<vmem>>, vector<64x128xf32>
    tpu.vector_store %arg6[%c0_5, %c0_6], %10 {strides = array<i32>} : memref<64x128xf32, #tpu.memory_space<vmem>>, vector<64x128xf32>,
    %c0_i32_7 = arith.constant 0 : i32
    %12 = arith.cmpi eq, %arg1, %c0_i32_7 : i32
    %13 = arith.extui %12 : i1 to i32
    %c0_i32_8 = arith.constant 0 : i32
    %14 = arith.cmpi ne, %13, %c0_i32_8 : i32
    scf.if %14 {
      %c0_9 = arith.constant 0 : index
      %c0_10 = arith.constant 0 : index
      %15 = vector.load %arg6[%c0_9, %c0_10] : memref<64x128xf32, #tpu.memory_space<vmem>>, vector<64x128xf32>
      %c0_11 = arith.constant 0 : index
      %c0_12 = arith.constant 0 : index
      %16 = vector.load %arg4[%c0_11, %c0_12] : memref<1x128xf32, #tpu.memory_space<vmem>>, vector<1x128xf32>
      %17 = vector.broadcast %16 : vector<1x128xf32> to vector<64x128xf32>
      %18 = arith.addf %15, %17 : vector<64x128xf32>
      %c0_13 = arith.constant 0 : index
      %c0_14 = arith.constant 0 : index
      %19 = vector.load %arg5[%c0_13, %c0_14] : memref<64x128xf32, #tpu.memory_space<vmem>>, vector<64x128xf32>
      tpu.vector_store %arg5[%c0_13, %c0_14], %18 {strides = array<i32>} : memref<64x128xf32, #tpu.memory_space<vmem>>, vector<64x128xf32>,
    } else {
    }
    return
  }
  func.func @transform_0(%arg0: i32, %arg1: i32) -> (i32, i32) {
    %c0_i32 = arith.constant 0 : i32
    return %arg0, %arg1 : i32, i32
  }
  func.func @transform_1(%arg0: i32, %arg1: i32) -> (i32, i32) {
    %c0_i32 = arith.constant 0 : i32
    %c0_i32_0 = arith.constant 0 : i32
    %c0_i32_1 = arith.constant 0 : i32
    return %c0_i32, %c0_i32_0 : i32, i32
  }
  func.func @transform_2(%arg0: i32, %arg1: i32) -> (i32, i32) {
    %c0_i32 = arith.constant 0 : i32
    %c0_i32_0 = arith.constant 0 : i32
    %c0_i32_1 = arith.constant 0 : i32
    return %c0_i32, %c0_i32_0 : i32, i32
  }
  func.func @transform_3(%arg0: i32, %arg1: i32) -> (i32, i32) {
    %c0_i32 = arith.constant 0 : i32
    %c0_i32_0 = arith.constant 0 : i32
    return %arg0, %c0_i32 : i32, i32
  }
}

</mosaic_0001>

<llo_original>
// kernel: gcn_forward.3
$region0: #{gcn_forward.3}
  #allocation0 [shape = 'u32[]', space=smem, size = 0x4, offset = 0x4, fixed_abs, tag = 'smem constant byte address 0x4 - core index']
  #allocation1 [shape = 'u32[72,128]{1,0:T(1,128)}', space=vmem, size = 0x9000, scoped, tag = 'internal scratch']
  %s0 = inlined_call_operand.vmem [shape: bf16[128,128], index: 0, kind: input, shape index: {}]
  %s1 = inlined_call_operand.vmem [shape: bf16[128,128], index: 1, kind: input, shape index: {}]
  %s2 = inlined_call_operand.vmem [shape: bf16[128,128], index: 2, kind: output, shape index: {}]
  %s3 = sld [smem:[#allocation0]]
  $region41: #{gcn_forward.3} parent=0
    _
  %s5 = ssub.s32 1, %s3
  %s6 = scalar_select 0, %s5, %s3
  loop: start=0, step=1, limit=4
  $region2: #{gcn_forward.3} parent=0 // loop_pre_header
    _
  $region3: #{gcn_forward.3} parent=0 // loop_header
    %s8 = sphi 0, %s12
    %p9 = scmp.ge.s32.totalorder %s8, 4
    %s18 = sphi 0, %s20
    %s21 = sphi 0, %s18
    %s22 = sphi 0, %s21
    %s38 = sphi 0, %s22
    %s42 = sphi 0, %s42
    %s44 = sphi 0, %s42
    %s45 = sphi 0, %s44
    %s59 = sphi 0, %s45
    %s65 = sphi 0, %s67
    %s68 = sphi 0, %s65
    %s69 = sphi 0, %s68
    %s85 = sphi 0, %s69
  $region4: #{gcn_forward.3} parent=0 // loop_header_branch
    %11 = sbr.rel (%p9) target = $region8
  $region5: #{gcn_forward.3} parent=0 // loop_body
    %s13 = ssub.s32 %s8, 1
    %s14 = ssub.s32 %s8, 2
    %s15 = sadd.s32 %s8, 1
    %s16 = ssub.s32 %s8, %s15
    %p17 = scmp.eq.s32.totalorder %s16, 0
    %s19 = sadd.s32 %s18, 1
    %s20 = scalar_select %p17, %s18, %s19
    %p23 = pneg %p17
    %p24 = scmp.eq.s32.totalorder %s8, 1
    %p25 = por %p23, %p24
    %p26 = scmp.ne.s32.totalorder %s18, %s21
    %p27 = scmp.eq.s32.totalorder %s8, 0
    %p28 = por %p26, %p27
    %p29 = scmp.ne.s32.totalorder %s18, %s21
    %p30 = scmp.eq.s32.totalorder %s13, 1
    %p31 = por %p29, %p30
    %p32 = scmp.ne.s32.totalorder %s21, %s22
    %p33 = scmp.eq.s32.totalorder %s13, 0
    %p34 = por %p32, %p33
    %p35 = scmp.ne.s32.totalorder %s21, %s22
    %p36 = scmp.eq.s32.totalorder %s14, 1
    %p37 = por %p35, %p36
    %p39 = scmp.ne.s32.totalorder %s22, %s38
    %p40 = scmp.eq.s32.totalorder %s14, 0
    %p41 = por %p39, %p40
    %s43 = sadd.s32 %s42, 1
    %p46 = scmp.eq.s32.totalorder %s8, 1
    %p47 = scmp.ne.s32.totalorder %s42, %s44
    %p48 = scmp.eq.s32.totalorder %s8, 0
    %p49 = por %p47, %p48
    %p50 = scmp.ne.s32.totalorder %s42, %s44
    %p51 = scmp.eq.s32.totalorder %s13, 1
    %p52 = por %p50, %p51
    %p53 = scmp.ne.s32.totalorder %s44, %s45
    %p54 = scmp.eq.s32.totalorder %s13, 0
    %p55 = por %p53, %p54
    %p56 = scmp.ne.s32.totalorder %s44, %s45
    %p57 = scmp.eq.s32.totalorder %s14, 1
    %p58 = por %p56, %p57
    %p60 = scmp.ne.s32.totalorder %s45, %s59
    %p61 = scmp.eq.s32.totalorder %s14, 0
    %p62 = por %p60, %p61
    %s63 = ssub.s32 %s8, %s15
    %p64 = scmp.eq.s32.totalorder %s63, 0
    %s66 = sadd.s32 %s65, 1
    %s67 = scalar_select %p64, %s65, %s66
    %p70 = pneg %p64
    %p71 = scmp.eq.s32.totalorder %s8, 1
    %p72 = por %p70, %p71
    %p73 = scmp.ne.s32.totalorder %s65, %s68
    %p74 = scmp.eq.s32.totalorder %s8, 0
    %p75 = por %p73, %p74
    %p76 = scmp.ne.s32.totalorder %s65, %s68
    %p77 = scmp.eq.s32.totalorder %s13, 1
    %p78 = por %p76, %p77
    %p79 = scmp.ne.s32.totalorder %s68, %s69
    %p80 = scmp.eq.s32.totalorder %s13, 0
    %p81 = por %p79, %p80
    %p82 = scmp.ne.s32.totalorder %s68, %s69
    %p83 = scmp.eq.s32.totalorder %s14, 1
    %p84 = por %p82, %p83
    %p86 = scmp.ne.s32.totalorder %s69, %s85
    %p87 = scmp.eq.s32.totalorder %s14, 0
    %p88 = por %p86, %p87
    %p89 = scmp.le.s32.totalorder 1, %s8
    %p90 = scmp.lt.s32.totalorder %s8, 3
    %p91 = pnand %p89, %p90
    %p92 = pneg %p91
    // Predicated region
    $region9: #{gcn_forward.3} parent=5 // pred_check
      _
    $region10: #{gcn_forward.3} parent=5 // pred_check_branch
      %94 = sbr.rel (%p91) target = $region12
    $region11: #{gcn_forward.3} parent=5 // pred_region
      %s95 = ssub.s32 %s8, 1
      // Predicated region
      $region13: #{gcn_forward.3} parent=11 // pred_check
        %p96 = pneg %p55
      $region14: #{gcn_forward.3} parent=11 // pred_check_branch
        %98 = sbr.rel (%p96) target = $region16
      $region15: #{gcn_forward.3} parent=11 // pred_region
        _
      $region16: #{gcn_forward.3} parent=11 // pred_fallthru
        _
    $region12: #{gcn_forward.3} parent=5 // pred_fallthru
      _
    %p99 = scmp.lt.s32.totalorder %s8, 2
    // Predicated region
    $region17: #{gcn_forward.3} parent=5 // pred_check
      %p100 = pneg %p99
    $region18: #{gcn_forward.3} parent=5 // pred_check_branch
      %102 = sbr.rel (%p100) target = $region20
    $region19: #{gcn_forward.3} parent=5 // pred_region
      // Predicated region
      $region21: #{gcn_forward.3} parent=19 // pred_check
        %p103 = pneg %p28
      $region22: #{gcn_forward.3} parent=19 // pred_check_branch
        %105 = sbr.rel (%p103) target = $region24
      $region23: #{gcn_forward.3} parent=19 // pred_region
        %s106 = smul.u32 8, %s8
        %p107 = scmp.lt.s32.totalorder %s106, 15
        %s108 = scalar_select %p107, %s106, 15
        %s109 = smul.addr %s108, 4
        %s110 = scalar_lea.vmem %s0, %s109
        %s111 = smul.u32 8, %s8
      $region24: #{gcn_forward.3} parent=19 // pred_fallthru
        _
    $region20: #{gcn_forward.3} parent=5 // pred_fallthru
      _
    %p112 = scmp.le.s32.totalorder 1, %s8
    %p113 = scmp.lt.s32.totalorder %s8, 3
    %p114 = pnand %p112, %p113
    %p115 = pneg %p114
    // Predicated region
    $region25: #{gcn_forward.3} parent=5 // pred_check
      _
    $region26: #{gcn_forward.3} parent=5 // pred_check_branch
      %117 = sbr.rel (%p114) target = $region28
    $region27: #{gcn_forward.3} parent=5 // pred_region
      %s118 = ssub.s32 %s8, 1
      %s119 = smul.u32 8, %s13
      %p120 = scmp.lt.s32.totalorder %s119, 15
      %s121 = scalar_select %p120, %s119, 15
      %s122 = smul.addr %s121, 4
      %s123 = scalar_lea.vmem %s0, %s122
      %p124 = pneg %p34
      %p125 = pneg %p31
      %p126 = pneg %p55
      %p127 = pneg %p52
      %p128 = pneg %p81
      %p129 = pneg %p78
      %s130 = smul.u32 8, %s13
      %p131 = scmp.lt.s32.totalorder %s130, 15
      %s132 = scalar_select %p131, %s130, 15
      %s133 = smul.addr %s132, 4
      %s134 = scalar_lea.vmem %s2, %s133
      %s135 = smul.u32 8, %s13
      %p136 = scmp.lt.s32.totalorder %s135, 15
      %s137 = scalar_select %p136, %s135, 15
      %s138 = smul.addr %s137, 4
      %s139 = scalar_lea.vmem %s0, %s138
      %s140 = smul.u32 8, %s13
      %s141 = smul.u32 8, %s13
      %p142 = scmp.lt.s32.totalorder %s141, 15
      %s143 = scalar_select %p142, %s141, 15
      %s144 = smul.addr %s143, 4
      %s145 = scalar_lea.vmem %s2, %s144
      %s146 = smul.u32 8, %s13
      %v147 = vld [vmem:[%s139] sm:$0xf]
      %v148 = vld [vmem:[%s139 + $0x4] sm:$0xf]
      %v149 = vld [vmem:[%s139 + $0x8] sm:$0xf]
      %v150 = vld [vmem:[%s139 + $0xc] sm:$0xf]
      %v151 = vld [vmem:[%s139 + $0x10] sm:$0xf]
      %v152 = vld [vmem:[%s139 + $0x14] sm:$0xf]
      %v153 = vld [vmem:[%s139 + $0x18] sm:$0xf]
      %v154 = vld [vmem:[%s139 + $0x1c] sm:$0xf]
      %v155 = vld [vmem:[%s1] sm:$0xf]
      %v156 = vld [vmem:[%s1 + $0x4] sm:$0xf]
      %v157 = vld [vmem:[%s1 + $0x8] sm:$0xf]
      %v158 = vld [vmem:[%s1 + $0xc] sm:$0xf]
      %v159 = vld [vmem:[%s1 + $0x10] sm:$0xf]
      %v160 = vld [vmem:[%s1 + $0x14] sm:$0xf]
      %v161 = vld [vmem:[%s1 + $0x18] sm:$0xf]
      %v162 = vld [vmem:[%s1 + $0x1c] sm:$0xf]
      %v163 = vld [vmem:[%s1 + $0x20] sm:$0xf]
      %v164 = vld [vmem:[%s1 + $0x24] sm:$0xf]
      %v165 = vld [vmem:[%s1 + $0x28] sm:$0xf]
      %v166 = vld [vmem:[%s1 + $0x2c] sm:$0xf]
      %v167 = vld [vmem:[%s1 + $0x30] sm:$0xf]
      %v168 = vld [vmem:[%s1 + $0x34] sm:$0xf]
      %v169 = vld [vmem:[%s1 + $0x38] sm:$0xf]
      %v170 = vld [vmem:[%s1 + $0x3c] sm:$0xf]
      %v179 = vunpack.c.l.b16 %v147
      %v180 = vunpack.c.l.b16 %v148
      %v181 = vunpack.c.l.b16 %v149
      %v182 = vunpack.c.l.b16 %v150
      %v183 = vunpack.c.l.b16 %v151
      %v184 = vunpack.c.l.b16 %v152
      %v185 = vunpack.c.l.b16 %v153
      %v186 = vunpack.c.l.b16 %v154
      %v187 = vpack.c.b16 %v180, %v179
      %v188 = vpack.c.b16 %v182, %v181
      %v189 = vpack.c.b16 %v184, %v183
      %v190 = vpack.c.b16 %v186, %v185
      %v211 = vunpack.c.l.b16 %v155
      %v212 = vunpack.c.l.b16 %v156
      %v213 = vunpack.c.l.b16 %v157
      %v214 = vunpack.c.l.b16 %v158
      %v215 = vunpack.c.l.b16 %v159
      %v216 = vunpack.c.l.b16 %v160
      %v217 = vunpack.c.l.b16 %v161
      %v218 = vunpack.c.l.b16 %v162
      %v219 = vunpack.c.l.b16 %v163
      %v220 = vunpack.c.l.b16 %v164
      %v221 = vunpack.c.l.b16 %v165
      %v222 = vunpack.c.l.b16 %v166
      %v223 = vunpack.c.l.b16 %v167
      %v224 = vunpack.c.l.b16 %v168
      %v225 = vunpack.c.l.b16 %v169
      %v226 = vunpack.c.l.b16 %v170
      %v227 = vpack.c.b16 %v212, %v211
      %v228 = vpack.c.b16 %v214, %v213
      %v229 = vpack.c.b16 %v216, %v215
      %v230 = vpack.c.b16 %v218, %v217
      %v231 = vpack.c.b16 %v220, %v219
      %v232 = vpack.c.b16 %v222, %v221
      %v233 = vpack.c.b16 %v224, %v223
      %v234 = vpack.c.b16 %v226, %v225
      %243 = vmatpush.bf16.msra.mxu0 %v234
      %244 = vmatpush.bf16.msra.mxu0 %v233
      %245 = vmatpush.bf16.msra.mxu0 %v232
      %246 = vmatpush.bf16.msra.mxu0 %v231
      %247 = vmatpush.bf16.msra.mxu0 %v230
      %248 = vmatpush.bf16.msra.mxu0 %v229
      %249 = vmatpush.bf16.msra.mxu0 %v228
      %250 = vmatpush.bf16.msra.mxu0 %v227
      %251 = vmatmul.bf16.gmra.mxu0 %v187
      %v252 = vpop.f32.mrf.mxu0
      %v253 = vadd.f32 0.0, %v252
      %v254 = vpop.f32.mrf.mxu0
      %v255 = vadd.f32 0.0, %v254
      %256 = vmatmul.bf16.gmra.mxu0 %v188
      %v257 = vpop.f32.mrf.mxu0
      %v258 = vadd.f32 0.0, %v257
      %v259 = vpop.f32.mrf.mxu0
      %v260 = vadd.f32 0.0, %v259
      %261 = vmatmul.bf16.gmra.mxu0 %v189
      %v262 = vpop.f32.mrf.mxu0
      %v263 = vadd.f32 0.0, %v262
      %v264 = vpop.f32.mrf.mxu0
      %v265 = vadd.f32 0.0, %v264
      %266 = vmatmul.bf16.gmra.mxu0 %v190
      %v267 = vpop.f32.mrf.mxu0
      %v268 = vadd.f32 0.0, %v267
      %v269 = vpop.f32.mrf.mxu0
      %v270 = vadd.f32 0.0, %v269
      %271 = vdwg.mxu0
      %v272 = vpack.c.bf16 %v253, %v253
      %v273 = vpack.c.bf16 %v255, %v255
      %v274 = vpack.c.bf16 %v258, %v258
      %v275 = vpack.c.bf16 %v260, %v260
      %v276 = vpack.c.bf16 %v263, %v263
      %v277 = vpack.c.bf16 %v265, %v265
      %v278 = vpack.c.bf16 %v268, %v268
      %v279 = vpack.c.bf16 %v270, %v270
      %280 = vst [vmem:[%s145] sm:$0xf] %v272
      %281 = vst [vmem:[%s145 + $0x4] sm:$0xf] %v273
      %282 = vst [vmem:[%s145 + $0x8] sm:$0xf] %v274
      %283 = vst [vmem:[%s145 + $0xc] sm:$0xf] %v275
      %284 = vst [vmem:[%s145 + $0x10] sm:$0xf] %v276
      %285 = vst [vmem:[%s145 + $0x14] sm:$0xf] %v277
      %286 = vst [vmem:[%s145 + $0x18] sm:$0xf] %v278
      %287 = vst [vmem:[%s145 + $0x1c] sm:$0xf] %v279
      %s288 = smul.u32 8, %s13
      %p289 = scmp.lt.s32.totalorder %s288, 15
      %s290 = scalar_select %p289, %s288, 15
      %s291 = smul.addr %s290, 4
      %s292 = scalar_lea.vmem %s2, %s291
      // Predicated region
      $region29: #{gcn_forward.3} parent=27 // pred_check
        %p293 = pneg %p78
      $region30: #{gcn_forward.3} parent=27 // pred_check_branch
        %295 = sbr.rel (%p293) target = $region32
      $region31: #{gcn_forward.3} parent=27 // pred_region
        %s296 = smul.u32 8, %s13
      $region32: #{gcn_forward.3} parent=27 // pred_fallthru
        _
    $region28: #{gcn_forward.3} parent=5 // pred_fallthru
      _
    %p297 = scmp.le.s32.totalorder 2, %s8
    // Predicated region
    $region33: #{gcn_forward.3} parent=5 // pred_check
      %p298 = pneg %p297
    $region34: #{gcn_forward.3} parent=5 // pred_check_branch
      %300 = sbr.rel (%p298) target = $region36
    $region35: #{gcn_forward.3} parent=5 // pred_region
      %s301 = ssub.s32 %s8, 2
      // Predicated region
      $region37: #{gcn_forward.3} parent=35 // pred_check
        %p302 = pneg %p84
      $region38: #{gcn_forward.3} parent=35 // pred_check_branch
        %304 = sbr.rel (%p302) target = $region40
      $region39: #{gcn_forward.3} parent=35 // pred_region
        %s305 = smul.u32 8, %s14
        %p306 = scmp.lt.s32.totalorder %s305, 15
        %s307 = scalar_select %p306, %s305, 15
        %s308 = smul.addr %s307, 4
        %s309 = scalar_lea.vmem %s2, %s308
      $region40: #{gcn_forward.3} parent=35 // pred_fallthru
        _
    $region36: #{gcn_forward.3} parent=5 // pred_fallthru
      _
  $region6: #{gcn_forward.3} parent=0 // loop_footer
    %s12 = sadd.s32 1, %s8
  $region7: #{gcn_forward.3} parent=0 // loop_footer_branch
    %7 = sbr.rel target = $region3
  $region8: #{gcn_forward.3} parent=0 // loop_exit
    _

// kernel: gcn_forward.5
$region0: #{gcn_forward.5}
  #allocation0 [shape = 'u32[]', space=smem, size = 0x4, offset = 0x4, fixed_abs, tag = 'smem constant byte address 0x4 - core index']
  #allocation1 [shape = 'u32[72,128]{1,0:T(1,128)}', space=vmem, size = 0x9000, scoped, tag = 'internal scratch']
  #allocation2 [shape = 'f32[64,128]{1,0:T(8,128)}', space=vmem, size = 0x8000, scoped, tag = 'scratch operand']
  %s0 = inlined_call_operand.vmem [shape: bf16[128,128], index: 0, kind: input, shape index: {}]
  %s1 = inlined_call_operand.vmem [shape: bf16[128,128], index: 1, kind: input, shape index: {}]
  %s2 = inlined_call_operand.vmem [shape: f32[1,128], index: 2, kind: input, shape index: {}]
  %s3 = inlined_call_operand.vmem [shape: f32[128,128], index: 3, kind: output, shape index: {}]
  %s4 = sld [smem:[#allocation0]]
  $region53: #{gcn_forward.5} parent=0
    _
  %s6 = ssub.s32 1, %s4
  %s7 = scalar_select 0, %s6, %s4
  loop: start=0, step=1, limit=4
  $region2: #{gcn_forward.5} parent=0 // loop_pre_header
    _
  $region3: #{gcn_forward.5} parent=0 // loop_header
    %s9 = sphi 0, %s13
    %p10 = scmp.ge.s32.totalorder %s9, 4
    %s16 = sphi 0, %s28
    %s17 = sphi 0, %s24
    %s18 = sphi 0, %s16
    %s19 = sphi 0, %s17
    %s20 = sphi 0, %s18
    %s21 = sphi 0, %s19
    %s33 = sphi 0, %s35
    %s36 = sphi 0, %s33
    %s37 = sphi 0, %s36
    %s53 = sphi 0, %s37
    %s57 = sphi 0, %s57
    %s59 = sphi 0, %s57
    %s60 = sphi 0, %s59
    %s74 = sphi 0, %s60
    %s78 = sphi 0, %s78
    %s80 = sphi 0, %s78
    %s81 = sphi 0, %s80
    %s95 = sphi 0, %s81
    %s101 = sphi 0, %s103
    %s104 = sphi 0, %s101
    %s105 = sphi 0, %s104
    %s121 = sphi 0, %s105
  $region4: #{gcn_forward.5} parent=0 // loop_header_branch
    %12 = sbr.rel (%p10) target = $region8
  $region5: #{gcn_forward.5} parent=0 // loop_body
    %s14 = ssub.s32 %s9, 1
    %s15 = ssub.s32 %s9, 2
    %s22 = sadd.s32 1, %s17
    %p23 = scmp.ge.s32.totalorder %s22, 1
    %s24 = scalar_select %p23, 0, %s22
    %s25 = sadd.s32 1, %s16
    %s26 = scalar_select %p23, %s25, %s16
    %p27 = scmp.ge.s32.totalorder %s26, 2
    %s28 = scalar_select %p27, 0, %s26
    %s29 = ssub.s32 %s16, %s28
    %s30 = ssub.s32 %s17, %s24
    %s31 = sor.u32 %s29, %s30
    %p32 = scmp.eq.s32.totalorder %s31, 0
    %s34 = sadd.s32 %s33, 1
    %s35 = scalar_select %p32, %s33, %s34
    %p38 = pneg %p32
    %p39 = scmp.eq.s32.totalorder %s9, 1
    %p40 = por %p38, %p39
    %p41 = scmp.ne.s32.totalorder %s33, %s36
    %p42 = scmp.eq.s32.totalorder %s9, 0
    %p43 = por %p41, %p42
    %p44 = scmp.ne.s32.totalorder %s33, %s36
    %p45 = scmp.eq.s32.totalorder %s14, 1
    %p46 = por %p44, %p45
    %p47 = scmp.ne.s32.totalorder %s36, %s37
    %p48 = scmp.eq.s32.totalorder %s14, 0
    %p49 = por %p47, %p48
    %p50 = scmp.ne.s32.totalorder %s36, %s37
    %p51 = scmp.eq.s32.totalorder %s15, 1
    %p52 = por %p50, %p51
    %p54 = scmp.ne.s32.totalorder %s37, %s53
    %p55 = scmp.eq.s32.totalorder %s15, 0
    %p56 = por %p54, %p55
    %s58 = sadd.s32 %s57, 1
    %p61 = scmp.eq.s32.totalorder %s9, 1
    %p62 = scmp.ne.s32.totalorder %s57, %s59
    %p63 = scmp.eq.s32.totalorder %s9, 0
    %p64 = por %p62, %p63
    %p65 = scmp.ne.s32.totalorder %s57, %s59
    %p66 = scmp.eq.s32.totalorder %s14, 1
    %p67 = por %p65, %p66
    %p68 = scmp.ne.s32.totalorder %s59, %s60
    %p69 = scmp.eq.s32.totalorder %s14, 0
    %p70 = por %p68, %p69
    %p71 = scmp.ne.s32.totalorder %s59, %s60
    %p72 = scmp.eq.s32.totalorder %s15, 1
    %p73 = por %p71, %p72
    %p75 = scmp.ne.s32.totalorder %s60, %s74
    %p76 = scmp.eq.s32.totalorder %s15, 0
    %p77 = por %p75, %p76
    %s79 = sadd.s32 %s78, 1
    %p82 = scmp.eq.s32.totalorder %s9, 1
    %p83 = scmp.ne.s32.totalorder %s78, %s80
    %p84 = scmp.eq.s32.totalorder %s9, 0
    %p85 = por %p83, %p84
    %p86 = scmp.ne.s32.totalorder %s78, %s80
    %p87 = scmp.eq.s32.totalorder %s14, 1
    %p88 = por %p86, %p87
    %p89 = scmp.ne.s32.totalorder %s80, %s81
    %p90 = scmp.eq.s32.totalorder %s14, 0
    %p91 = por %p89, %p90
    %p92 = scmp.ne.s32.totalorder %s80, %s81
    %p93 = scmp.eq.s32.totalorder %s15, 1
    %p94 = por %p92, %p93
    %p96 = scmp.ne.s32.totalorder %s81, %s95
    %p97 = scmp.eq.s32.totalorder %s15, 0
    %p98 = por %p96, %p97
    %s99 = ssub.s32 %s16, %s28
    %p100 = scmp.eq.s32.totalorder %s99, 0
    %s102 = sadd.s32 %s101, 1
    %s103 = scalar_select %p100, %s101, %s102
    %p106 = pneg %p100
    %p107 = scmp.eq.s32.totalorder %s9, 1
    %p108 = por %p106, %p107
    %p109 = scmp.ne.s32.totalorder %s101, %s104
    %p110 = scmp.eq.s32.totalorder %s9, 0
    %p111 = por %p109, %p110
    %p112 = scmp.ne.s32.totalorder %s101, %s104
    %p113 = scmp.eq.s32.totalorder %s14, 1
    %p114 = por %p112, %p113
    %p115 = scmp.ne.s32.totalorder %s104, %s105
    %p116 = scmp.eq.s32.totalorder %s14, 0
    %p117 = por %p115, %p116
    %p118 = scmp.ne.s32.totalorder %s104, %s105
    %p119 = scmp.eq.s32.totalorder %s15, 1
    %p120 = por %p118, %p119
    %p122 = scmp.ne.s32.totalorder %s105, %s121
    %p123 = scmp.eq.s32.totalorder %s15, 0
    %p124 = por %p122, %p123
    %p125 = scmp.le.s32.totalorder 1, %s9
    %p126 = scmp.lt.s32.totalorder %s9, 3
    %p127 = pnand %p125, %p126
    %p128 = pneg %p127
    // Predicated region
    $region9: #{gcn_forward.5} parent=5 // pred_check
      _
    $region10: #{gcn_forward.5} parent=5 // pred_check_branch
      %130 = sbr.rel (%p127) target = $region12
    $region11: #{gcn_forward.5} parent=5 // pred_region
      %s131 = ssub.s32 %s9, 1
      // Predicated region
      $region13: #{gcn_forward.5} parent=11 // pred_check
        %p132 = pneg %p70
      $region14: #{gcn_forward.5} parent=11 // pred_check_branch
        %134 = sbr.rel (%p132) target = $region16
      $region15: #{gcn_forward.5} parent=11 // pred_region
        _
      $region16: #{gcn_forward.5} parent=11 // pred_fallthru
        _
      // Predicated region
      $region17: #{gcn_forward.5} parent=11 // pred_check
        %p135 = pneg %p91
      $region18: #{gcn_forward.5} parent=11 // pred_check_branch
        %137 = sbr.rel (%p135) target = $region20
      $region19: #{gcn_forward.5} parent=11 // pred_region
        _
      $region20: #{gcn_forward.5} parent=11 // pred_fallthru
        _
    $region12: #{gcn_forward.5} parent=5 // pred_fallthru
      _
    %p138 = scmp.lt.s32.totalorder %s9, 2
    // Predicated region
    $region21: #{gcn_forward.5} parent=5 // pred_check
      %p139 = pneg %p138
    $region22: #{gcn_forward.5} parent=5 // pred_check_branch
      %141 = sbr.rel (%p139) target = $region24
    $region23: #{gcn_forward.5} parent=5 // pred_region
      // Predicated region
      $region25: #{gcn_forward.5} parent=23 // pred_check
        %p142 = pneg %p43
      $region26: #{gcn_forward.5} parent=23 // pred_check_branch
        %144 = sbr.rel (%p142) target = $region28
      $region27: #{gcn_forward.5} parent=23 // pred_region
        %s145 = smul.u32 8, %s16
        %p146 = scmp.lt.s32.totalorder %s145, 15
        %s147 = scalar_select %p146, %s145, 15
        %p148 = scmp.lt.s32.totalorder %s17, 0
        %s149 = scalar_select %p148, %s17, 0
        %s150 = sadd.s32 %s149, %s147
        %s151 = smul.addr %s150, 4
        %s152 = scalar_lea.vmem %s0, %s151
        %s153 = smul.u32 8, %s16
      $region28: #{gcn_forward.5} parent=23 // pred_fallthru
        _
    $region24: #{gcn_forward.5} parent=5 // pred_fallthru
      _
    %p154 = scmp.le.s32.totalorder 1, %s9
    %p155 = scmp.lt.s32.totalorder %s9, 3
    %p156 = pnand %p154, %p155
    %p157 = pneg %p156
    // Predicated region
    $region29: #{gcn_forward.5} parent=5 // pred_check
      _
    $region30: #{gcn_forward.5} parent=5 // pred_check_branch
      %159 = sbr.rel (%p156) target = $region32
    $region31: #{gcn_forward.5} parent=5 // pred_region
      %s160 = ssub.s32 %s9, 1
      %s161 = smul.u32 8, %s18
      %p162 = scmp.lt.s32.totalorder %s161, 15
      %s163 = scalar_select %p162, %s161, 15
      %p164 = scmp.lt.s32.totalorder %s19, 0
      %s165 = scalar_select %p164, %s19, 0
      %s166 = sadd.s32 %s165, %s163
      %s167 = smul.addr %s166, 4
      %s168 = scalar_lea.vmem %s0, %s167
      %p169 = pneg %p49
      %p170 = pneg %p46
      %p171 = pneg %p70
      %p172 = pneg %p67
      %p173 = pneg %p91
      %p174 = pneg %p88
      %p175 = pneg %p117
      %p176 = pneg %p114
      %s177 = smul.u32 8, %s18
      %p178 = scmp.lt.s32.totalorder %s177, 15
      %s179 = scalar_select %p178, %s177, 15
      %s180 = smul.addr %s179, 8
      %s181 = scalar_lea.vmem %s3, %s180
      %s182 = smul.u32 8, %s18
      %p183 = scmp.lt.s32.totalorder %s182, 15
      %s184 = scalar_select %p183, %s182, 15
      %p185 = scmp.lt.s32.totalorder %s19, 0
      %s186 = scalar_select %p185, %s19, 0
      %s187 = sadd.s32 %s186, %s184
      %s188 = smul.addr %s187, 4
      %s189 = scalar_lea.vmem %s0, %s188
      %s190 = smul.u32 8, %s18
      %s191 = smul.u32 8, %s18
      %p192 = scmp.lt.s32.totalorder %s191, 15
      %s193 = scalar_select %p192, %s191, 15
      %s194 = smul.addr %s193, 8
      %s195 = scalar_lea.vmem %s3, %s194
      %s196 = smul.u32 8, %s18
      %p197 = scmp.eq.s32.totalorder %s19, 0
      // Predicated region
      $region33: #{gcn_forward.5} parent=31 // pred_check
        %p198 = pneg %p197
      $region34: #{gcn_forward.5} parent=31 // pred_check_branch
        %200 = sbr.rel (%p198) target = $region36
      $region35: #{gcn_forward.5} parent=31 // pred_region
        %201 = vst [vmem:[#allocation2] sm:$0xff] 0.0
        %202 = vst [vmem:[#allocation2 + $0x8] sm:$0xff] 0.0
        %203 = vst [vmem:[#allocation2 + $0x10] sm:$0xff] 0.0
        %204 = vst [vmem:[#allocation2 + $0x18] sm:$0xff] 0.0
        %205 = vst [vmem:[#allocation2 + $0x20] sm:$0xff] 0.0
        %206 = vst [vmem:[#allocation2 + $0x28] sm:$0xff] 0.0
        %207 = vst [vmem:[#allocation2 + $0x30] sm:$0xff] 0.0
        %208 = vst [vmem:[#allocation2 + $0x38] sm:$0xff] 0.0
      $region36: #{gcn_forward.5} parent=31 // pred_fallthru
        _
      %s209 = smul.u32 %s19, 128
      %s210 = sshra.s32 %s209, 3
      %s211 = sand.u32 %s209, 7
      %s212 = smul.addr %s210, 4
      %s213 = scalar_lea.vmem %s1, %s212
      %v214 = vld [vmem:[%s213] sm:$0xf]
      %v215 = vld [vmem:[%s213 + $0x4] sm:$0xf]
      %v216 = vld [vmem:[%s213 + $0x8] sm:$0xf]
      %v217 = vld [vmem:[%s213 + $0xc] sm:$0xf]
      %v218 = vld [vmem:[%s213 + $0x10] sm:$0xf]
      %v219 = vld [vmem:[%s213 + $0x14] sm:$0xf]
      %v220 = vld [vmem:[%s213 + $0x18] sm:$0xf]
      %v221 = vld [vmem:[%s213 + $0x1c] sm:$0xf]
      %v222 = vld [vmem:[%s213 + $0x20] sm:$0xf]
      %v223 = vld [vmem:[%s213 + $0x24] sm:$0xf]
      %v224 = vld [vmem:[%s213 + $0x28] sm:$0xf]
      %v225 = vld [vmem:[%s213 + $0x2c] sm:$0xf]
      %v226 = vld [vmem:[%s213 + $0x30] sm:$0xf]
      %v227 = vld [vmem:[%s213 + $0x34] sm:$0xf]
      %v228 = vld [vmem:[%s213 + $0x38] sm:$0xf]
      %v229 = vld [vmem:[%s213 + $0x3c] sm:$0xf]
      %v230 = vld [vmem:[#allocation2] sm:$0xff]
      %v231 = vld [vmem:[#allocation2 + $0x8] sm:$0xff]
      %v232 = vld [vmem:[#allocation2 + $0x10] sm:$0xff]
      %v233 = vld [vmem:[#allocation2 + $0x18] sm:$0xff]
      %v234 = vld [vmem:[#allocation2 + $0x20] sm:$0xff]
      %v235 = vld [vmem:[#allocation2 + $0x28] sm:$0xff]
      %v236 = vld [vmem:[#allocation2 + $0x30] sm:$0xff]
      %v237 = vld [vmem:[#allocation2 + $0x38] sm:$0xff]
      %v238 = vld [vmem:[%s189] sm:$0xf]
      %v239 = vld [vmem:[%s189 + $0x4] sm:$0xf]
      %v240 = vld [vmem:[%s189 + $0x8] sm:$0xf]
      %v241 = vld [vmem:[%s189 + $0xc] sm:$0xf]
      %v242 = vld [vmem:[%s189 + $0x10] sm:$0xf]
      %v243 = vld [vmem:[%s189 + $0x14] sm:$0xf]
      %v244 = vld [vmem:[%s189 + $0x18] sm:$0xf]
      %v245 = vld [vmem:[%s189 + $0x1c] sm:$0xf]
      %v254 = vunpack.c.l.b16 %v238
      %v255 = vunpack.c.l.b16 %v239
      %v256 = vunpack.c.l.b16 %v240
      %v257 = vunpack.c.l.b16 %v241
      %v258 = vunpack.c.l.b16 %v242
      %v259 = vunpack.c.l.b16 %v243
      %v260 = vunpack.c.l.b16 %v244
      %v261 = vunpack.c.l.b16 %v245
      %v262 = vpack.c.b16 %v255, %v254
      %v263 = vpack.c.b16 %v257, %v256
      %v264 = vpack.c.b16 %v259, %v258
      %v265 = vpack.c.b16 %v261, %v260
      %v286 = vunpack.c.l.b16 %v214
      %v287 = vunpack.c.l.b16 %v215
      %v288 = vunpack.c.l.b16 %v216
      %v289 = vunpack.c.l.b16 %v217
      %v290 = vunpack.c.l.b16 %v218
      %v291 = vunpack.c.l.b16 %v219
      %v292 = vunpack.c.l.b16 %v220
      %v293 = vunpack.c.l.b16 %v221
      %v294 = vunpack.c.l.b16 %v222
      %v295 = vunpack.c.l.b16 %v223
      %v296 = vunpack.c.l.b16 %v224
      %v297 = vunpack.c.l.b16 %v225
      %v298 = vunpack.c.l.b16 %v226
      %v299 = vunpack.c.l.b16 %v227
      %v300 = vunpack.c.l.b16 %v228
      %v301 = vunpack.c.l.b16 %v229
      %v302 = vpack.c.b16 %v287, %v286
      %v303 = vpack.c.b16 %v289, %v288
      %v304 = vpack.c.b16 %v291, %v290
      %v305 = vpack.c.b16 %v293, %v292
      %v306 = vpack.c.b16 %v295, %v294
      %v307 = vpack.c.b16 %v297, %v296
      %v308 = vpack.c.b16 %v299, %v298
      %v309 = vpack.c.b16 %v301, %v300
      %318 = vmatpush.bf16.msra.mxu0 %v309
      %319 = vmatpush.bf16.msra.mxu0 %v308
      %320 = vmatpush.bf16.msra.mxu0 %v307
      %321 = vmatpush.bf16.msra.mxu0 %v306
      %322 = vmatpush.bf16.msra.mxu0 %v305
      %323 = vmatpush.bf16.msra.mxu0 %v304
      %324 = vmatpush.bf16.msra.mxu0 %v303
      %325 = vmatpush.bf16.msra.mxu0 %v302
      %326 = vmatmul.bf16.gmra.mxu0 %v262
      %v327 = vpop.f32.mrf.mxu0
      %v328 = vadd.f32 0.0, %v327
      %v329 = vpop.f32.mrf.mxu0
      %v330 = vadd.f32 0.0, %v329
      %331 = vmatmul.bf16.gmra.mxu0 %v263
      %v332 = vpop.f32.mrf.mxu0
      %v333 = vadd.f32 0.0, %v332
      %v334 = vpop.f32.mrf.mxu0
      %v335 = vadd.f32 0.0, %v334
      %336 = vmatmul.bf16.gmra.mxu0 %v264
      %v337 = vpop.f32.mrf.mxu0
      %v338 = vadd.f32 0.0, %v337
      %v339 = vpop.f32.mrf.mxu0
      %v340 = vadd.f32 0.0, %v339
      %341 = vmatmul.bf16.gmra.mxu0 %v265
      %v342 = vpop.f32.mrf.mxu0
      %v343 = vadd.f32 0.0, %v342
      %v344 = vpop.f32.mrf.mxu0
      %v345 = vadd.f32 0.0, %v344
      %346 = vdwg.mxu0
      %v347 = vadd.f32 %v230, %v328
      %v348 = vadd.f32 %v231, %v330
      %v349 = vadd.f32 %v232, %v333
      %v350 = vadd.f32 %v233, %v335
      %v351 = vadd.f32 %v234, %v338
      %v352 = vadd.f32 %v235, %v340
      %v353 = vadd.f32 %v236, %v343
      %v354 = vadd.f32 %v237, %v345
      %355 = vst [vmem:[#allocation2] sm:$0xff] %v347
      %356 = vst [vmem:[#allocation2 + $0x8] sm:$0xff] %v348
      %357 = vst [vmem:[#allocation2 + $0x10] sm:$0xff] %v349
      %358 = vst [vmem:[#allocation2 + $0x18] sm:$0xff] %v350
      %359 = vst [vmem:[#allocation2 + $0x20] sm:$0xff] %v351
      %360 = vst [vmem:[#allocation2 + $0x28] sm:$0xff] %v352
      %361 = vst [vmem:[#allocation2 + $0x30] sm:$0xff] %v353
      %362 = vst [vmem:[#allocation2 + $0x38] sm:$0xff] %v354
      // Predicated region
      $region37: #{gcn_forward.5} parent=31 // pred_check
        %p363 = pneg %p197
      $region38: #{gcn_forward.5} parent=31 // pred_check_branch
        %365 = sbr.rel (%p363) target = $region40
      $region39: #{gcn_forward.5} parent=31 // pred_region
        %v366 = vld [vmem:[#allocation2] sm:$0xff]
        %v367 = vld [vmem:[#allocation2 + $0x8] sm:$0xff]
        %v368 = vld [vmem:[#allocation2 + $0x10] sm:$0xff]
        %v369 = vld [vmem:[#allocation2 + $0x18] sm:$0xff]
        %v370 = vld [vmem:[#allocation2 + $0x20] sm:$0xff]
        %v371 = vld [vmem:[#allocation2 + $0x28] sm:$0xff]
        %v372 = vld [vmem:[#allocation2 + $0x30] sm:$0xff]
        %v373 = vld [vmem:[#allocation2 + $0x38] sm:$0xff]
        %v374 = vld [vmem:[%s2] sm:$0x1]
        %v376 = vperm.slane %v374, 0
        %v378 = vadd.f32 %v366, %v376
        %v379 = vadd.f32 %v367, %v376
        %v380 = vadd.f32 %v368, %v376
        %v381 = vadd.f32 %v369, %v376
        %v382 = vadd.f32 %v370, %v376
        %v383 = vadd.f32 %v371, %v376
        %v384 = vadd.f32 %v372, %v376
        %v385 = vadd.f32 %v373, %v376
        %386 = vst [vmem:[%s195] sm:$0xff] %v378
        %387 = vst [vmem:[%s195 + $0x8] sm:$0xff] %v379
        %388 = vst [vmem:[%s195 + $0x10] sm:$0xff] %v380
        %389 = vst [vmem:[%s195 + $0x18] sm:$0xff] %v381
        %390 = vst [vmem:[%s195 + $0x20] sm:$0xff] %v382
        %391 = vst [vmem:[%s195 + $0x28] sm:$0xff] %v383
        %392 = vst [vmem:[%s195 + $0x30] sm:$0xff] %v384
        %393 = vst [vmem:[%s195 + $0x38] sm:$0xff] %v385
      $region40: #{gcn_forward.5} parent=31 // pred_fallthru
        _
      %s394 = smul.u32 8, %s18
      %p395 = scmp.lt.s32.totalorder %s394, 15
      %s396 = scalar_select %p395, %s394, 15
      %s397 = smul.addr %s396, 8
      %s398 = scalar_lea.vmem %s3, %s397
      // Predicated region
      $region41: #{gcn_forward.5} parent=31 // pred_check
        %p399 = pneg %p114
      $region42: #{gcn_forward.5} parent=31 // pred_check_branch
        %401 = sbr.rel (%p399) target = $region44
      $region43: #{gcn_forward.5} parent=31 // pred_region
        %s402 = smul.u32 8, %s18
      $region44: #{gcn_forward.5} parent=31 // pred_fallthru
        _
    $region32: #{gcn_forward.5} parent=5 // pred_fallthru
      _
    %p403 = scmp.le.s32.totalorder 2, %s9
    // Predicated region
    $region45: #{gcn_forward.5} parent=5 // pred_check
      %p404 = pneg %p403
    $region46: #{gcn_forward.5} parent=5 // pred_check_branch
      %406 = sbr.rel (%p404) target = $region48
    $region47: #{gcn_forward.5} parent=5 // pred_region
      %s407 = ssub.s32 %s9, 2
      // Predicated region
      $region49: #{gcn_forward.5} parent=47 // pred_check
        %p408 = pneg %p120
      $region50: #{gcn_forward.5} parent=47 // pred_check_branch
        %410 = sbr.rel (%p408) target = $region52
      $region51: #{gcn_forward.5} parent=47 // pred_region
        %s411 = smul.u32 8, %s20
        %p412 = scmp.lt.s32.totalorder %s411, 15
        %s413 = scalar_select %p412, %s411, 15
        %s414 = smul.addr %s413, 8
        %s415 = scalar_lea.vmem %s3, %s414
      $region52: #{gcn_forward.5} parent=47 // pred_fallthru
        _
    $region48: #{gcn_forward.5} parent=5 // pred_fallthru
      _
  $region6: #{gcn_forward.5} parent=0 // loop_footer
    %s13 = sadd.s32 1, %s9
  $region7: #{gcn_forward.5} parent=0 // loop_footer_branch
    %8 = sbr.rel target = $region3
  $region8: #{gcn_forward.5} parent=0 // loop_exit
    _

// kernel: gcn_forward.4
$region0: #{gcn_forward.4}
  #allocation0 [shape = 'u32[]', space=smem, size = 0x4, offset = 0x4, fixed_abs, tag = 'smem constant byte address 0x4 - core index']
  #allocation1 [shape = 'u32[72,128]{1,0:T(1,128)}', space=vmem, size = 0x9000, scoped, tag = 'internal scratch']
  #allocation2 [shape = 'f32[64,128]{1,0:T(8,128)}', space=vmem, size = 0x8000, scoped, tag = 'scratch operand']
  %s0 = inlined_call_operand.vmem [shape: bf16[128,128], index: 0, kind: input, shape index: {}]
  %s1 = inlined_call_operand.vmem [shape: bf16[128,128], index: 1, kind: input, shape index: {}]
  %s2 = inlined_call_operand.vmem [shape: f32[1,128], index: 2, kind: input, shape index: {}]
  %s3 = inlined_call_operand.vmem [shape: bf16[128,128], index: 3, kind: input, shape index: {}]
  %s4 = inlined_call_operand.vmem [shape: bf16[128,128], index: 4, kind: output, shape index: {}]
  %s5 = sld [smem:[#allocation0]]
  $region57: #{gcn_forward.4} parent=0
    _
  %s7 = ssub.s32 1, %s5
  %s8 = scalar_select 0, %s7, %s5
  loop: start=0, step=1, limit=4
  $region2: #{gcn_forward.4} parent=0 // loop_pre_header
    _
  $region3: #{gcn_forward.4} parent=0 // loop_header
    %s10 = sphi 0, %s14
    %p11 = scmp.ge.s32.totalorder %s10, 4
    %s17 = sphi 0, %s29
    %s18 = sphi 0, %s25
    %s19 = sphi 0, %s17
    %s20 = sphi 0, %s18
    %s21 = sphi 0, %s19
    %s22 = sphi 0, %s20
    %s34 = sphi 0, %s36
    %s37 = sphi 0, %s34
    %s38 = sphi 0, %s37
    %s54 = sphi 0, %s38
    %s58 = sphi 0, %s58
    %s60 = sphi 0, %s58
    %s61 = sphi 0, %s60
    %s75 = sphi 0, %s61
    %s79 = sphi 0, %s79
    %s81 = sphi 0, %s79
    %s82 = sphi 0, %s81
    %s96 = sphi 0, %s82
    %s100 = sphi 0, %s100
    %s102 = sphi 0, %s100
    %s103 = sphi 0, %s102
    %s117 = sphi 0, %s103
    %s123 = sphi 0, %s125
    %s126 = sphi 0, %s123
    %s127 = sphi 0, %s126
    %s143 = sphi 0, %s127
  $region4: #{gcn_forward.4} parent=0 // loop_header_branch
    %13 = sbr.rel (%p11) target = $region8
  $region5: #{gcn_forward.4} parent=0 // loop_body
    %s15 = ssub.s32 %s10, 1
    %s16 = ssub.s32 %s10, 2
    %s23 = sadd.s32 1, %s18
    %p24 = scmp.ge.s32.totalorder %s23, 1
    %s25 = scalar_select %p24, 0, %s23
    %s26 = sadd.s32 1, %s17
    %s27 = scalar_select %p24, %s26, %s17
    %p28 = scmp.ge.s32.totalorder %s27, 2
    %s29 = scalar_select %p28, 0, %s27
    %s30 = ssub.s32 %s17, %s29
    %s31 = ssub.s32 %s18, %s25
    %s32 = sor.u32 %s30, %s31
    %p33 = scmp.eq.s32.totalorder %s32, 0
    %s35 = sadd.s32 %s34, 1
    %s36 = scalar_select %p33, %s34, %s35
    %p39 = pneg %p33
    %p40 = scmp.eq.s32.totalorder %s10, 1
    %p41 = por %p39, %p40
    %p42 = scmp.ne.s32.totalorder %s34, %s37
    %p43 = scmp.eq.s32.totalorder %s10, 0
    %p44 = por %p42, %p43
    %p45 = scmp.ne.s32.totalorder %s34, %s37
    %p46 = scmp.eq.s32.totalorder %s15, 1
    %p47 = por %p45, %p46
    %p48 = scmp.ne.s32.totalorder %s37, %s38
    %p49 = scmp.eq.s32.totalorder %s15, 0
    %p50 = por %p48, %p49
    %p51 = scmp.ne.s32.totalorder %s37, %s38
    %p52 = scmp.eq.s32.totalorder %s16, 1
    %p53 = por %p51, %p52
    %p55 = scmp.ne.s32.totalorder %s38, %s54
    %p56 = scmp.eq.s32.totalorder %s16, 0
    %p57 = por %p55, %p56
    %s59 = sadd.s32 %s58, 1
    %p62 = scmp.eq.s32.totalorder %s10, 1
    %p63 = scmp.ne.s32.totalorder %s58, %s60
    %p64 = scmp.eq.s32.totalorder %s10, 0
    %p65 = por %p63, %p64
    %p66 = scmp.ne.s32.totalorder %s58, %s60
    %p67 = scmp.eq.s32.totalorder %s15, 1
    %p68 = por %p66, %p67
    %p69 = scmp.ne.s32.totalorder %s60, %s61
    %p70 = scmp.eq.s32.totalorder %s15, 0
    %p71 = por %p69, %p70
    %p72 = scmp.ne.s32.totalorder %s60, %s61
    %p73 = scmp.eq.s32.totalorder %s16, 1
    %p74 = por %p72, %p73
    %p76 = scmp.ne.s32.totalorder %s61, %s75
    %p77 = scmp.eq.s32.totalorder %s16, 0
    %p78 = por %p76, %p77
    %s80 = sadd.s32 %s79, 1
    %p83 = scmp.eq.s32.totalorder %s10, 1
    %p84 = scmp.ne.s32.totalorder %s79, %s81
    %p85 = scmp.eq.s32.totalorder %s10, 0
    %p86 = por %p84, %p85
    %p87 = scmp.ne.s32.totalorder %s79, %s81
    %p88 = scmp.eq.s32.totalorder %s15, 1
    %p89 = por %p87, %p88
    %p90 = scmp.ne.s32.totalorder %s81, %s82
    %p91 = scmp.eq.s32.totalorder %s15, 0
    %p92 = por %p90, %p91
    %p93 = scmp.ne.s32.totalorder %s81, %s82
    %p94 = scmp.eq.s32.totalorder %s16, 1
    %p95 = por %p93, %p94
    %p97 = scmp.ne.s32.totalorder %s82, %s96
    %p98 = scmp.eq.s32.totalorder %s16, 0
    %p99 = por %p97, %p98
    %s101 = sadd.s32 %s100, 1
    %p104 = scmp.eq.s32.totalorder %s10, 1
    %p105 = scmp.ne.s32.totalorder %s100, %s102
    %p106 = scmp.eq.s32.totalorder %s10, 0
    %p107 = por %p105, %p106
    %p108 = scmp.ne.s32.totalorder %s100, %s102
    %p109 = scmp.eq.s32.totalorder %s15, 1
    %p110 = por %p108, %p109
    %p111 = scmp.ne.s32.totalorder %s102, %s103
    %p112 = scmp.eq.s32.totalorder %s15, 0
    %p113 = por %p111, %p112
    %p114 = scmp.ne.s32.totalorder %s102, %s103
    %p115 = scmp.eq.s32.totalorder %s16, 1
    %p116 = por %p114, %p115
    %p118 = scmp.ne.s32.totalorder %s103, %s117
    %p119 = scmp.eq.s32.totalorder %s16, 0
    %p120 = por %p118, %p119
    %s121 = ssub.s32 %s17, %s29
    %p122 = scmp.eq.s32.totalorder %s121, 0
    %s124 = sadd.s32 %s123, 1
    %s125 = scalar_select %p122, %s123, %s124
    %p128 = pneg %p122
    %p129 = scmp.eq.s32.totalorder %s10, 1
    %p130 = por %p128, %p129
    %p131 = scmp.ne.s32.totalorder %s123, %s126
    %p132 = scmp.eq.s32.totalorder %s10, 0
    %p133 = por %p131, %p132
    %p134 = scmp.ne.s32.totalorder %s123, %s126
    %p135 = scmp.eq.s32.totalorder %s15, 1
    %p136 = por %p134, %p135
    %p137 = scmp.ne.s32.totalorder %s126, %s127
    %p138 = scmp.eq.s32.totalorder %s15, 0
    %p139 = por %p137, %p138
    %p140 = scmp.ne.s32.totalorder %s126, %s127
    %p141 = scmp.eq.s32.totalorder %s16, 1
    %p142 = por %p140, %p141
    %p144 = scmp.ne.s32.totalorder %s127, %s143
    %p145 = scmp.eq.s32.totalorder %s16, 0
    %p146 = por %p144, %p145
    %p147 = scmp.le.s32.totalorder 1, %s10
    %p148 = scmp.lt.s32.totalorder %s10, 3
    %p149 = pnand %p147, %p148
    %p150 = pneg %p149
    // Predicated region
    $region9: #{gcn_forward.4} parent=5 // pred_check
      _
    $region10: #{gcn_forward.4} parent=5 // pred_check_branch
      %152 = sbr.rel (%p149) target = $region12
    $region11: #{gcn_forward.4} parent=5 // pred_region
      %s153 = ssub.s32 %s10, 1
      // Predicated region
      $region13: #{gcn_forward.4} parent=11 // pred_check
        %p154 = pneg %p71
      $region14: #{gcn_forward.4} parent=11 // pred_check_branch
        %156 = sbr.rel (%p154) target = $region16
      $region15: #{gcn_forward.4} parent=11 // pred_region
        _
      $region16: #{gcn_forward.4} parent=11 // pred_fallthru
        _
      // Predicated region
      $region17: #{gcn_forward.4} parent=11 // pred_check
        %p157 = pneg %p92
      $region18: #{gcn_forward.4} parent=11 // pred_check_branch
        %159 = sbr.rel (%p157) target = $region20
      $region19: #{gcn_forward.4} parent=11 // pred_region
        _
      $region20: #{gcn_forward.4} parent=11 // pred_fallthru
        _
      // Predicated region
      $region21: #{gcn_forward.4} parent=11 // pred_check
        %p160 = pneg %p113
      $region22: #{gcn_forward.4} parent=11 // pred_check_branch
        %162 = sbr.rel (%p160) target = $region24
      $region23: #{gcn_forward.4} parent=11 // pred_region
        _
      $region24: #{gcn_forward.4} parent=11 // pred_fallthru
        _
    $region12: #{gcn_forward.4} parent=5 // pred_fallthru
      _
    %p163 = scmp.lt.s32.totalorder %s10, 2
    // Predicated region
    $region25: #{gcn_forward.4} parent=5 // pred_check
      %p164 = pneg %p163
    $region26: #{gcn_forward.4} parent=5 // pred_check_branch
      %166 = sbr.rel (%p164) target = $region28
    $region27: #{gcn_forward.4} parent=5 // pred_region
      // Predicated region
      $region29: #{gcn_forward.4} parent=27 // pred_check
        %p167 = pneg %p44
      $region30: #{gcn_forward.4} parent=27 // pred_check_branch
        %169 = sbr.rel (%p167) target = $region32
      $region31: #{gcn_forward.4} parent=27 // pred_region
        %s170 = smul.u32 8, %s17
        %p171 = scmp.lt.s32.totalorder %s170, 15
        %s172 = scalar_select %p171, %s170, 15
        %p173 = scmp.lt.s32.totalorder %s18, 0
        %s174 = scalar_select %p173, %s18, 0
        %s175 = sadd.s32 %s174, %s172
        %s176 = smul.addr %s175, 4
        %s177 = scalar_lea.vmem %s0, %s176
        %s178 = smul.u32 8, %s17
      $region32: #{gcn_forward.4} parent=27 // pred_fallthru
        _
    $region28: #{gcn_forward.4} parent=5 // pred_fallthru
      _
    %p179 = scmp.le.s32.totalorder 1, %s10
    %p180 = scmp.lt.s32.totalorder %s10, 3
    %p181 = pnand %p179, %p180
    %p182 = pneg %p181
    // Predicated region
    $region33: #{gcn_forward.4} parent=5 // pred_check
      _
    $region34: #{gcn_forward.4} parent=5 // pred_check_branch
      %184 = sbr.rel (%p181) target = $region36
    $region35: #{gcn_forward.4} parent=5 // pred_region
      %s185 = ssub.s32 %s10, 1
      %s186 = smul.u32 8, %s19
      %p187 = scmp.lt.s32.totalorder %s186, 15
      %s188 = scalar_select %p187, %s186, 15
      %p189 = scmp.lt.s32.totalorder %s20, 0
      %s190 = scalar_select %p189, %s20, 0
      %s191 = sadd.s32 %s190, %s188
      %s192 = smul.addr %s191, 4
      %s193 = scalar_lea.vmem %s0, %s192
      %p194 = pneg %p50
      %p195 = pneg %p47
      %p196 = pneg %p71
      %p197 = pneg %p68
      %p198 = pneg %p92
      %p199 = pneg %p89
      %p200 = pneg %p113
      %p201 = pneg %p110
      %p202 = pneg %p139
      %p203 = pneg %p136
      %s204 = smul.u32 8, %s19
      %p205 = scmp.lt.s32.totalorder %s204, 15
      %s206 = scalar_select %p205, %s204, 15
      %s207 = smul.addr %s206, 4
      %s208 = scalar_lea.vmem %s4, %s207
      %s209 = smul.u32 8, %s19
      %p210 = scmp.lt.s32.totalorder %s209, 15
      %s211 = scalar_select %p210, %s209, 15
      %p212 = scmp.lt.s32.totalorder %s20, 0
      %s213 = scalar_select %p212, %s20, 0
      %s214 = sadd.s32 %s213, %s211
      %s215 = smul.addr %s214, 4
      %s216 = scalar_lea.vmem %s0, %s215
      %s217 = smul.u32 8, %s19
      %s218 = smul.u32 8, %s19
      %p219 = scmp.lt.s32.totalorder %s218, 15
      %s220 = scalar_select %p219, %s218, 15
      %s221 = smul.addr %s220, 4
      %s222 = scalar_lea.vmem %s4, %s221
      %s223 = smul.u32 8, %s19
      %p224 = scmp.eq.s32.totalorder %s20, 0
      // Predicated region
      $region37: #{gcn_forward.4} parent=35 // pred_check
        %p225 = pneg %p224
      $region38: #{gcn_forward.4} parent=35 // pred_check_branch
        %227 = sbr.rel (%p225) target = $region40
      $region39: #{gcn_forward.4} parent=35 // pred_region
        %228 = vst [vmem:[#allocation2] sm:$0xff] 0.0
        %229 = vst [vmem:[#allocation2 + $0x8] sm:$0xff] 0.0
        %230 = vst [vmem:[#allocation2 + $0x10] sm:$0xff] 0.0
        %231 = vst [vmem:[#allocation2 + $0x18] sm:$0xff] 0.0
        %232 = vst [vmem:[#allocation2 + $0x20] sm:$0xff] 0.0
        %233 = vst [vmem:[#allocation2 + $0x28] sm:$0xff] 0.0
        %234 = vst [vmem:[#allocation2 + $0x30] sm:$0xff] 0.0
        %235 = vst [vmem:[#allocation2 + $0x38] sm:$0xff] 0.0
      $region40: #{gcn_forward.4} parent=35 // pred_fallthru
        _
      %s236 = smul.u32 %s20, 128
      %s237 = sshra.s32 %s236, 3
      %s238 = sand.u32 %s236, 7
      %s239 = smul.addr %s237, 4
      %s240 = scalar_lea.vmem %s1, %s239
      %v241 = vld [vmem:[%s240] sm:$0xf]
      %v242 = vld [vmem:[%s240 + $0x4] sm:$0xf]
      %v243 = vld [vmem:[%s240 + $0x8] sm:$0xf]
      %v244 = vld [vmem:[%s240 + $0xc] sm:$0xf]
      %v245 = vld [vmem:[%s240 + $0x10] sm:$0xf]
      %v246 = vld [vmem:[%s240 + $0x14] sm:$0xf]
      %v247 = vld [vmem:[%s240 + $0x18] sm:$0xf]
      %v248 = vld [vmem:[%s240 + $0x1c] sm:$0xf]
      %v249 = vld [vmem:[%s240 + $0x20] sm:$0xf]
      %v250 = vld [vmem:[%s240 + $0x24] sm:$0xf]
      %v251 = vld [vmem:[%s240 + $0x28] sm:$0xf]
      %v252 = vld [vmem:[%s240 + $0x2c] sm:$0xf]
      %v253 = vld [vmem:[%s240 + $0x30] sm:$0xf]
      %v254 = vld [vmem:[%s240 + $0x34] sm:$0xf]
      %v255 = vld [vmem:[%s240 + $0x38] sm:$0xf]
      %v256 = vld [vmem:[%s240 + $0x3c] sm:$0xf]
      %v257 = vld [vmem:[#allocation2] sm:$0xff]
      %v258 = vld [vmem:[#allocation2 + $0x8] sm:$0xff]
      %v259 = vld [vmem:[#allocation2 + $0x10] sm:$0xff]
      %v260 = vld [vmem:[#allocation2 + $0x18] sm:$0xff]
      %v261 = vld [vmem:[#allocation2 + $0x20] sm:$0xff]
      %v262 = vld [vmem:[#allocation2 + $0x28] sm:$0xff]
      %v263 = vld [vmem:[#allocation2 + $0x30] sm:$0xff]
      %v264 = vld [vmem:[#allocation2 + $0x38] sm:$0xff]
      %v265 = vld [vmem:[%s216] sm:$0xf]
      %v266 = vld [vmem:[%s216 + $0x4] sm:$0xf]
      %v267 = vld [vmem:[%s216 + $0x8] sm:$0xf]
      %v268 = vld [vmem:[%s216 + $0xc] sm:$0xf]
      %v269 = vld [vmem:[%s216 + $0x10] sm:$0xf]
      %v270 = vld [vmem:[%s216 + $0x14] sm:$0xf]
      %v271 = vld [vmem:[%s216 + $0x18] sm:$0xf]
      %v272 = vld [vmem:[%s216 + $0x1c] sm:$0xf]
      %v281 = vunpack.c.l.b16 %v265
      %v282 = vunpack.c.l.b16 %v266
      %v283 = vunpack.c.l.b16 %v267
      %v284 = vunpack.c.l.b16 %v268
      %v285 = vunpack.c.l.b16 %v269
      %v286 = vunpack.c.l.b16 %v270
      %v287 = vunpack.c.l.b16 %v271
      %v288 = vunpack.c.l.b16 %v272
      %v289 = vpack.c.b16 %v282, %v281
      %v290 = vpack.c.b16 %v284, %v283
      %v291 = vpack.c.b16 %v286, %v285
      %v292 = vpack.c.b16 %v288, %v287
      %v313 = vunpack.c.l.b16 %v241
      %v314 = vunpack.c.l.b16 %v242
      %v315 = vunpack.c.l.b16 %v243
      %v316 = vunpack.c.l.b16 %v244
      %v317 = vunpack.c.l.b16 %v245
      %v318 = vunpack.c.l.b16 %v246
      %v319 = vunpack.c.l.b16 %v247
      %v320 = vunpack.c.l.b16 %v248
      %v321 = vunpack.c.l.b16 %v249
      %v322 = vunpack.c.l.b16 %v250
      %v323 = vunpack.c.l.b16 %v251
      %v324 = vunpack.c.l.b16 %v252
      %v325 = vunpack.c.l.b16 %v253
      %v326 = vunpack.c.l.b16 %v254
      %v327 = vunpack.c.l.b16 %v255
      %v328 = vunpack.c.l.b16 %v256
      %v329 = vpack.c.b16 %v314, %v313
      %v330 = vpack.c.b16 %v316, %v315
      %v331 = vpack.c.b16 %v318, %v317
      %v332 = vpack.c.b16 %v320, %v319
      %v333 = vpack.c.b16 %v322, %v321
      %v334 = vpack.c.b16 %v324, %v323
      %v335 = vpack.c.b16 %v326, %v325
      %v336 = vpack.c.b16 %v328, %v327
      %345 = vmatpush.bf16.msra.mxu0 %v336
      %346 = vmatpush.bf16.msra.mxu0 %v335
      %347 = vmatpush.bf16.msra.mxu0 %v334
      %348 = vmatpush.bf16.msra.mxu0 %v333
      %349 = vmatpush.bf16.msra.mxu0 %v332
      %350 = vmatpush.bf16.msra.mxu0 %v331
      %351 = vmatpush.bf16.msra.mxu0 %v330
      %352 = vmatpush.bf16.msra.mxu0 %v329
      %353 = vmatmul.bf16.gmra.mxu0 %v289
      %v354 = vpop.f32.mrf.mxu0
      %v355 = vadd.f32 0.0, %v354
      %v356 = vpop.f32.mrf.mxu0
      %v357 = vadd.f32 0.0, %v356
      %358 = vmatmul.bf16.gmra.mxu0 %v290
      %v359 = vpop.f32.mrf.mxu0
      %v360 = vadd.f32 0.0, %v359
      %v361 = vpop.f32.mrf.mxu0
      %v362 = vadd.f32 0.0, %v361
      %363 = vmatmul.bf16.gmra.mxu0 %v291
      %v364 = vpop.f32.mrf.mxu0
      %v365 = vadd.f32 0.0, %v364
      %v366 = vpop.f32.mrf.mxu0
      %v367 = vadd.f32 0.0, %v366
      %368 = vmatmul.bf16.gmra.mxu0 %v292
      %v369 = vpop.f32.mrf.mxu0
      %v370 = vadd.f32 0.0, %v369
      %v371 = vpop.f32.mrf.mxu0
      %v372 = vadd.f32 0.0, %v371
      %373 = vdwg.mxu0
      %v374 = vadd.f32 %v257, %v355
      %v375 = vadd.f32 %v258, %v357
      %v376 = vadd.f32 %v259, %v360
      %v377 = vadd.f32 %v260, %v362
      %v378 = vadd.f32 %v261, %v365
      %v379 = vadd.f32 %v262, %v367
      %v380 = vadd.f32 %v263, %v370
      %v381 = vadd.f32 %v264, %v372
      %382 = vst [vmem:[#allocation2] sm:$0xff] %v374
      %383 = vst [vmem:[#allocation2 + $0x8] sm:$0xff] %v375
      %384 = vst [vmem:[#allocation2 + $0x10] sm:$0xff] %v376
      %385 = vst [vmem:[#allocation2 + $0x18] sm:$0xff] %v377
      %386 = vst [vmem:[#allocation2 + $0x20] sm:$0xff] %v378
      %387 = vst [vmem:[#allocation2 + $0x28] sm:$0xff] %v379
      %388 = vst [vmem:[#allocation2 + $0x30] sm:$0xff] %v380
      %389 = vst [vmem:[#allocation2 + $0x38] sm:$0xff] %v381
      // Predicated region
      $region41: #{gcn_forward.4} parent=35 // pred_check
        %p390 = pneg %p224
      $region42: #{gcn_forward.4} parent=35 // pred_check_branch
        %392 = sbr.rel (%p390) target = $region44
      $region43: #{gcn_forward.4} parent=35 // pred_region
        %v393 = vld [vmem:[#allocation2] sm:$0xff]
        %v394 = vld [vmem:[#allocation2 + $0x8] sm:$0xff]
        %v395 = vld [vmem:[#allocation2 + $0x10] sm:$0xff]
        %v396 = vld [vmem:[#allocation2 + $0x18] sm:$0xff]
        %v397 = vld [vmem:[#allocation2 + $0x20] sm:$0xff]
        %v398 = vld [vmem:[#allocation2 + $0x28] sm:$0xff]
        %v399 = vld [vmem:[#allocation2 + $0x30] sm:$0xff]
        %v400 = vld [vmem:[#allocation2 + $0x38] sm:$0xff]
        %v401 = vld [vmem:[%s2] sm:$0x1]
        %v403 = vperm.slane %v401, 0
        %v405 = vadd.f32 %v393, %v403
        %v406 = vadd.f32 %v394, %v403
        %v407 = vadd.f32 %v395, %v403
        %v408 = vadd.f32 %v396, %v403
        %v409 = vadd.f32 %v397, %v403
        %v410 = vadd.f32 %v398, %v403
        %v411 = vadd.f32 %v399, %v403
        %v412 = vadd.f32 %v400, %v403
        %v413 = vmax.f32 %v405, 0.0
        %v414 = vmax.f32 %v406, 0.0
        %v415 = vmax.f32 %v407, 0.0
        %v416 = vmax.f32 %v408, 0.0
        %v417 = vmax.f32 %v409, 0.0
        %v418 = vmax.f32 %v410, 0.0
        %v419 = vmax.f32 %v411, 0.0
        %v420 = vmax.f32 %v412, 0.0
        %v421 = vpack.c.bf16 %v414, %v413
        %v422 = vpack.c.bf16 %v416, %v415
        %v423 = vpack.c.bf16 %v418, %v417
        %v424 = vpack.c.bf16 %v420, %v419
        %v425 = vld [vmem:[%s3] sm:$0xf]
        %v426 = vld [vmem:[%s3 + $0x4] sm:$0xf]
        %v427 = vld [vmem:[%s3 + $0x8] sm:$0xf]
        %v428 = vld [vmem:[%s3 + $0xc] sm:$0xf]
        %v429 = vld [vmem:[%s3 + $0x10] sm:$0xf]
        %v430 = vld [vmem:[%s3 + $0x14] sm:$0xf]
        %v431 = vld [vmem:[%s3 + $0x18] sm:$0xf]
        %v432 = vld [vmem:[%s3 + $0x1c] sm:$0xf]
        %v433 = vld [vmem:[%s3 + $0x20] sm:$0xf]
        %v434 = vld [vmem:[%s3 + $0x24] sm:$0xf]
        %v435 = vld [vmem:[%s3 + $0x28] sm:$0xf]
        %v436 = vld [vmem:[%s3 + $0x2c] sm:$0xf]
        %v437 = vld [vmem:[%s3 + $0x30] sm:$0xf]
        %v438 = vld [vmem:[%s3 + $0x34] sm:$0xf]
        %v439 = vld [vmem:[%s3 + $0x38] sm:$0xf]
        %v440 = vld [vmem:[%s3 + $0x3c] sm:$0xf]
        %v457 = vunpack.c.l.b16 %v425
        %v458 = vunpack.c.l.b16 %v426
        %v459 = vunpack.c.l.b16 %v427
        %v460 = vunpack.c.l.b16 %v428
        %v461 = vunpack.c.l.b16 %v429
        %v462 = vunpack.c.l.b16 %v430
        %v463 = vunpack.c.l.b16 %v431
        %v464 = vunpack.c.l.b16 %v432
        %v465 = vunpack.c.l.b16 %v433
        %v466 = vunpack.c.l.b16 %v434
        %v467 = vunpack.c.l.b16 %v435
        %v468 = vunpack.c.l.b16 %v436
        %v469 = vunpack.c.l.b16 %v437
        %v470 = vunpack.c.l.b16 %v438
        %v471 = vunpack.c.l.b16 %v439
        %v472 = vunpack.c.l.b16 %v440
        %v473 = vpack.c.b16 %v458, %v457
        %v474 = vpack.c.b16 %v460, %v459
        %v475 = vpack.c.b16 %v462, %v461
        %v476 = vpack.c.b16 %v464, %v463
        %v477 = vpack.c.b16 %v466, %v465
        %v478 = vpack.c.b16 %v468, %v467
        %v479 = vpack.c.b16 %v470, %v469
        %v480 = vpack.c.b16 %v472, %v471
        %489 = vmatpush.bf16.msra.mxu0 %v480
        %490 = vmatpush.bf16.msra.mxu0 %v479
        %491 = vmatpush.bf16.msra.mxu0 %v478
        %492 = vmatpush.bf16.msra.mxu0 %v477
        %493 = vmatpush.bf16.msra.mxu0 %v476
        %494 = vmatpush.bf16.msra.mxu0 %v475
        %495 = vmatpush.bf16.msra.mxu0 %v474
        %496 = vmatpush.bf16.msra.mxu0 %v473
        %497 = vmatmul.bf16.gmra.mxu0 %v421
        %v498 = vpop.f32.mrf.mxu0
        %v499 = vadd.f32 0.0, %v498
        %v500 = vpop.f32.mrf.mxu0
        %v501 = vadd.f32 0.0, %v500
        %502 = vmatmul.bf16.gmra.mxu0 %v422
        %v503 = vpop.f32.mrf.mxu0
        %v504 = vadd.f32 0.0, %v503
        %v505 = vpop.f32.mrf.mxu0
        %v506 = vadd.f32 0.0, %v505
        %507 = vmatmul.bf16.gmra.mxu0 %v423
        %v508 = vpop.f32.mrf.mxu0
        %v509 = vadd.f32 0.0, %v508
        %v510 = vpop.f32.mrf.mxu0
        %v511 = vadd.f32 0.0, %v510
        %512 = vmatmul.bf16.gmra.mxu0 %v424
        %v513 = vpop.f32.mrf.mxu0
        %v514 = vadd.f32 0.0, %v513
        %v515 = vpop.f32.mrf.mxu0
        %v516 = vadd.f32 0.0, %v515
        %517 = vdwg.mxu0
        %v518 = vpack.c.bf16 %v499, %v499
        %v519 = vpack.c.bf16 %v501, %v501
        %v520 = vpack.c.bf16 %v504, %v504
        %v521 = vpack.c.bf16 %v506, %v506
        %v522 = vpack.c.bf16 %v509, %v509
        %v523 = vpack.c.bf16 %v511, %v511
        %v524 = vpack.c.bf16 %v514, %v514
        %v525 = vpack.c.bf16 %v516, %v516
        %526 = vst [vmem:[%s222] sm:$0xf] %v518
        %527 = vst [vmem:[%s222 + $0x4] sm:$0xf] %v519
        %528 = vst [vmem:[%s222 + $0x8] sm:$0xf] %v520
        %529 = vst [vmem:[%s222 + $0xc] sm:$0xf] %v521
        %530 = vst [vmem:[%s222 + $0x10] sm:$0xf] %v522
        %531 = vst [vmem:[%s222 + $0x14] sm:$0xf] %v523
        %532 = vst [vmem:[%s222 + $0x18] sm:$0xf] %v524
        %533 = vst [vmem:[%s222 + $0x1c] sm:$0xf] %v525
      $region44: #{gcn_forward.4} parent=35 // pred_fallthru
        _
      %s534 = smul.u32 8, %s19
      %p535 = scmp.lt.s32.totalorder %s534, 15
      %s536 = scalar_select %p535, %s534, 15
      %s537 = smul.addr %s536, 4
      %s538 = scalar_lea.vmem %s4, %s537
      // Predicated region
      $region45: #{gcn_forward.4} parent=35 // pred_check
        %p539 = pneg %p136
      $region46: #{gcn_forward.4} parent=35 // pred_check_branch
        %541 = sbr.rel (%p539) target = $region48
      $region47: #{gcn_forward.4} parent=35 // pred_region
        %s542 = smul.u32 8, %s19
      $region48: #{gcn_forward.4} parent=35 // pred_fallthru
        _
    $region36: #{gcn_forward.4} parent=5 // pred_fallthru
      _
    %p543 = scmp.le.s32.totalorder 2, %s10
    // Predicated region
    $region49: #{gcn_forward.4} parent=5 // pred_check
      %p544 = pneg %p543
    $region50: #{gcn_forward.4} parent=5 // pred_check_branch
      %546 = sbr.rel (%p544) target = $region52
    $region51: #{gcn_forward.4} parent=5 // pred_region
      %s547 = ssub.s32 %s10, 2
      // Predicated region
      $region53: #{gcn_forward.4} parent=51 // pred_check
        %p548 = pneg %p142
      $region54: #{gcn_forward.4} parent=51 // pred_check_branch
        %550 = sbr.rel (%p548) target = $region56
      $region55: #{gcn_forward.4} parent=51 // pred_region
        %s551 = smul.u32 8, %s21
        %p552 = scmp.lt.s32.totalorder %s551, 15
        %s553 = scalar_select %p552, %s551, 15
        %s554 = smul.addr %s553, 4
        %s555 = scalar_lea.vmem %s4, %s554
      $region56: #{gcn_forward.4} parent=51 // pred_fallthru
        _
    $region52: #{gcn_forward.4} parent=5 // pred_fallthru
      _
  $region6: #{gcn_forward.4} parent=0 // loop_footer
    %s14 = sadd.s32 1, %s10
  $region7: #{gcn_forward.4} parent=0 // loop_footer_branch
    %9 = sbr.rel target = $region3
  $region8: #{gcn_forward.4} parent=0 // loop_exit
    _

</llo_original>
